<compile_context>
chip_gen: v7x
topology: tpu7x:2x2x1
jax: 0.10.0
libtpu: 0.0.40
codegen_flags: <defaults>
</compile_context>

<pallas_src>
import functools

import jax
import jax.numpy as jnp
from jax.experimental import pallas as pl
from jax.experimental.pallas import tpu as pltpu


def self_attention_kernel(x_ref, wqkv_ref, bqkv_ref, wo_ref, bo_ref, o_ref,
                          *, heads, head_dim, feat, inv_scale):
    F = feat
    x = x_ref[0]                                     # (N, C) f32
    xb = x.astype(jnp.bfloat16)

    # Fused QKV projection: one wide MXU matmul, fp32 accumulation, fp32 bias.
    qkv = jnp.dot(xb, wqkv_ref[...],
                  preferred_element_type=jnp.float32) + bqkv_ref[...]  # (N, 3F)

    # Fold the softmax scale into Q (cheaper than dividing the (N,N) scores).
    q = qkv[:, 0 * F:1 * F] * inv_scale
    k = qkv[:, 1 * F:2 * F]
    v = qkv[:, 2 * F:3 * F]

    # Split heads: (N, F) -> (H, N, Dh) via static lane slices + a leading-axis
    # stack (leading-axis stack is layout-cheap; for production Dh=64/128 the
    # lane slices are tile-aligned).
    def split_heads(t):
        return jnp.stack(
            [t[:, h * head_dim:(h + 1) * head_dim] for h in range(heads)],
            axis=0)

    q3 = split_heads(q).astype(jnp.bfloat16)         # (H, N, Dh)
    k3 = split_heads(k).astype(jnp.bfloat16)         # (H, N, Dh)
    v3 = split_heads(v).astype(jnp.bfloat16)         # (H, N, Dh)

    # Batched attention scores; contracting the last axes of both operands
    # avoids materializing K^T.
    s = jnp.einsum('hqd,hkd->hqk', q3, k3,
                   preferred_element_type=jnp.float32)      # (H, N, N) f32

    # Softmax in fp32; normalization reciprocal on the EUP.
    s = s - jnp.max(s, axis=-1, keepdims=True)
    p = jnp.exp(s)
    p = p * pl.reciprocal(jnp.sum(p, axis=-1, keepdims=True), approx=True)

    # Per-head attention output, then the output projection as a batched
    # per-head matmul summed over heads (replaces the lane-axis concat).
    o = jnp.einsum('hqk,hkd->hqd', p.astype(jnp.bfloat16), v3,
                   preferred_element_type=jnp.float32)      # (H, N, Dh) f32
    out = jnp.einsum('hnd,hdc->hnc', o.astype(jnp.bfloat16), wo_ref[...],
                     preferred_element_type=jnp.float32)    # (H, N, C) f32
    out = jnp.sum(out, axis=0) + bo_ref[...]                # (N, C)

    o_ref[0] = out.astype(o_ref.dtype)


def self_attention(x, params, heads, head_dim):
    B, N, C = x.shape
    F = heads * head_dim
    wq, bq, wk, bk, wv, bv, wo, bo = params

    # Host-side parameter prep: fuse QKV, reshape Wo per-head, bf16 weights
    # (halves weight DMA bytes / VMEM; doubles MXU throughput on v6e/v7x).
    wqkv = jnp.concatenate([wq, wk, wv], axis=1).astype(jnp.bfloat16)   # (C, 3F)
    bqkv = jnp.concatenate([bq, bk, bv], axis=1).astype(jnp.float32)    # (1, 3F)
    wo3 = wo.reshape(heads, head_dim, C).astype(jnp.bfloat16)           # (H, Dh, C)
    bo2 = bo.reshape(1, C).astype(jnp.float32)                          # (1, C)

    inv_scale = 1.0 / (float(head_dim) ** 0.5)

    kernel = functools.partial(self_attention_kernel, heads=heads,
                               head_dim=head_dim, feat=F, inv_scale=inv_scale)

    def full(shape):
        return pl.BlockSpec(shape, lambda i, _s=shape: (0,) * len(_s))

    return pl.pallas_call(
        kernel,
        out_shape=jax.ShapeDtypeStruct((B, N, C), x.dtype),
        grid_spec=pltpu.PrefetchScalarGridSpec(
            num_scalar_prefetch=0,
            grid=(B,),
            in_specs=[
                pl.BlockSpec((1, N, C), lambda i: (i, 0, 0)),   # x
                full((C, 3 * F)),                               # fused Wqkv
                full((1, 3 * F)),                               # fused bias
                full((heads, head_dim, C)),                     # Wo per head
                full((1, C)),                                   # bo
            ],
            out_specs=pl.BlockSpec((1, N, C), lambda i: (i, 0, 0)),
        ),
        compiler_params=pltpu.CompilerParams(
            dimension_semantics=("parallel",),
            vmem_limit_bytes=32 * 1024 * 1024),
    )(x, wqkv, bqkv, wo3, bo2)


def reference(x, params, heads, head_dim):
    """Pure-JAX fp32 reference mirroring the PyTorch module."""
    wq, bq, wk, bk, wv, bv, wo, bo = params
    B, N, C = x.shape
    scale = float(head_dim) ** 0.5

    def proj(x, w, b):
        return (x @ w + b).reshape(B, N, heads, head_dim)

    q = proj(x, wq, bq).transpose(0, 2, 1, 3)
    k = proj(x, wk, bk).transpose(0, 2, 1, 3)
    v = proj(x, wv, bv).transpose(0, 2, 1, 3)
    attn = jax.nn.softmax(jnp.einsum("bhqd,bhkd->bhqk", q, k) / scale, axis=-1)
    out = jnp.einsum("bhqk,bhkd->bhqd", attn, v).transpose(0, 2, 1, 3)
    return out.reshape(B, N, heads * head_dim) @ wo + bo


if __name__ == "__main__":
    B, N, C = 2, 8, 32
    heads = 8
    head_dim = C // heads          # 4
    F = heads * head_dim

    key = jax.random.PRNGKey(0)
    kx, kq, kk, kv, ko, kbq, kbk, kbv, kbo = jax.random.split(key, 9)

    x = jax.random.normal(kx, (B, N, C), jnp.float32)

    # Xavier-ish scaling keeps attention logits O(1) so the bf16-vs-fp32
    # comparison below is meaningful (raw randn weights make the softmax
    # hyper-sensitive to operand rounding).
    w_scale = 1.0 / (C ** 0.5)
    wq = jax.random.normal(kq, (C, F), jnp.float32) * w_scale
    wk = jax.random.normal(kk, (C, F), jnp.float32) * w_scale
    wv = jax.random.normal(kv, (C, F), jnp.float32) * w_scale
    wo = jax.random.normal(ko, (F, C), jnp.float32) * w_scale
    bq = jax.random.normal(kbq, (1, F), jnp.float32) * 0.1
    bk = jax.random.normal(kbk, (1, F), jnp.float32) * 0.1
    bv = jax.random.normal(kbv, (1, F), jnp.float32) * 0.1
    bo = jax.random.normal(kbo, (1, C), jnp.float32) * 0.1

    params = (wq, bq, wk, bk, wv, bv, wo, bo)

    out = jax.block_until_ready(self_attention(x, params, heads, head_dim))
    ref = reference(x, params, heads, head_dim)

    assert out.shape == (B, N, C)
    # bf16 matmul operands (fp32 accumulation) -> loosened tolerance vs the
    # pure-fp32 reference, as anticipated in the perf review.
    max_abs = float(jnp.max(jnp.abs(out - ref)))
    assert jnp.allclose(out, ref, rtol=5e-2, atol=1e-1), \
        f"mismatch vs reference (max abs diff {max_abs})"

    print("KERNEL_OK")
</pallas_src>

<mosaic_0001>
module attributes {stable_mosaic.version = 11 : i64} {
  func.func @self_attention_kernel(%arg0: i32, %arg1: memref<1x8x32xf32, #tpu.memory_space<vmem>>, %arg2: memref<32x96xbf16, #tpu.memory_space<vmem>>, %arg3: memref<1x96xf32, #tpu.memory_space<vmem>>, %arg4: memref<8x4x32xbf16, #tpu.memory_space<vmem>>, %arg5: memref<1x32xf32, #tpu.memory_space<vmem>>, %arg6: memref<1x8x32xf32, #tpu.memory_space<vmem>>) attributes {dimension_semantics = [#tpu.dimension_semantics<parallel>], iteration_bounds = array<i64: 2>, scalar_prefetch = 0 : i64, scratch_operands = 0 : i64, tpu.core_type = #tpu.core_type<tc>, window_params = [{transform_indices = @transform_0, window_bounds = array<i64: 1, 8, 32>}, {pipeline_mode = #tpu.pipeline_mode<synchronous>, transform_indices = @transform_1, window_bounds = array<i64: 32, 96>}, {pipeline_mode = #tpu.pipeline_mode<synchronous>, transform_indices = @transform_2, window_bounds = array<i64: 1, 96>}, {pipeline_mode = #tpu.pipeline_mode<synchronous>, transform_indices = @transform_3, window_bounds = array<i64: 8, 4, 32>}, {pipeline_mode = #tpu.pipeline_mode<synchronous>, transform_indices = @transform_4, window_bounds = array<i64: 1, 32>}, {transform_indices = @transform_5, window_bounds = array<i64: 1, 8, 32>}]} {
    %c0 = arith.constant 0 : index
    %c0_0 = arith.constant 0 : index
    %c0_1 = arith.constant 0 : index
    %0 = vector.load %arg1[%c0, %c0_0, %c0_1] : memref<1x8x32xf32, #tpu.memory_space<vmem>>, vector<1x8x32xf32>
    %1 = vector.shape_cast %0 : vector<1x8x32xf32> to vector<8x32xf32>
    %2 = arith.truncf %1 : vector<8x32xf32> to vector<8x32xbf16>
    %c0_2 = arith.constant 0 : index
    %c0_3 = arith.constant 0 : index
    %3 = vector.load %arg2[%c0_2, %c0_3] : memref<32x96xbf16, #tpu.memory_space<vmem>>, vector<32x96xbf16>
    %cst = arith.constant dense<0.000000e+00> : vector<8x96xf32>
    %4 = tpu.matmul %2, %3, %cst {dimension_numbers = #tpu.dot_dimension_numbers<[1], [0], [0], [1], [0, 0, 1, 1], [], []>} : vector<8x32xbf16>, vector<32x96xbf16>, vector<8x96xf32> -> vector<8x96xf32>
    %c0_4 = arith.constant 0 : index
    %c0_5 = arith.constant 0 : index
    %5 = vector.load %arg3[%c0_4, %c0_5] : memref<1x96xf32, #tpu.memory_space<vmem>>, vector<1x96xf32>
    %6 = vector.broadcast %5 : vector<1x96xf32> to vector<8x96xf32>
    %7 = arith.addf %4, %6 : vector<8x96xf32>
    %8 = vector.extract_strided_slice %7 {offsets = [0, 0], sizes = [8, 32], strides = [1, 1]} : vector<8x96xf32> to vector<8x32xf32>
    %cst_6 = arith.constant 5.000000e-01 : f32
    %9 = vector.broadcast %cst_6 : f32 to vector<8x32xf32>
    %10 = arith.mulf %8, %9 : vector<8x32xf32>
    %11 = vector.extract_strided_slice %7 {offsets = [0, 32], sizes = [8, 32], strides = [1, 1]} : vector<8x96xf32> to vector<8x32xf32>
    %12 = vector.extract_strided_slice %7 {offsets = [0, 64], sizes = [8, 32], strides = [1, 1]} : vector<8x96xf32> to vector<8x32xf32>
    %13 = vector.extract_strided_slice %10 {offsets = [0, 0], sizes = [8, 4], strides = [1, 1]} : vector<8x32xf32> to vector<8x4xf32>
    %14 = vector.extract_strided_slice %10 {offsets = [0, 4], sizes = [8, 4], strides = [1, 1]} : vector<8x32xf32> to vector<8x4xf32>
    %15 = vector.extract_strided_slice %10 {offsets = [0, 8], sizes = [8, 4], strides = [1, 1]} : vector<8x32xf32> to vector<8x4xf32>
    %16 = vector.extract_strided_slice %10 {offsets = [0, 12], sizes = [8, 4], strides = [1, 1]} : vector<8x32xf32> to vector<8x4xf32>
    %17 = vector.extract_strided_slice %10 {offsets = [0, 16], sizes = [8, 4], strides = [1, 1]} : vector<8x32xf32> to vector<8x4xf32>
    %18 = vector.extract_strided_slice %10 {offsets = [0, 20], sizes = [8, 4], strides = [1, 1]} : vector<8x32xf32> to vector<8x4xf32>
    %19 = vector.extract_strided_slice %10 {offsets = [0, 24], sizes = [8, 4], strides = [1, 1]} : vector<8x32xf32> to vector<8x4xf32>
    %20 = vector.extract_strided_slice %10 {offsets = [0, 28], sizes = [8, 4], strides = [1, 1]} : vector<8x32xf32> to vector<8x4xf32>
    %21 = vector.shape_cast %13 : vector<8x4xf32> to vector<1x8x4xf32>
    %22 = vector.shape_cast %14 : vector<8x4xf32> to vector<1x8x4xf32>
    %23 = vector.shape_cast %15 : vector<8x4xf32> to vector<1x8x4xf32>
    %24 = vector.shape_cast %16 : vector<8x4xf32> to vector<1x8x4xf32>
    %25 = vector.shape_cast %17 : vector<8x4xf32> to vector<1x8x4xf32>
    %26 = vector.shape_cast %18 : vector<8x4xf32> to vector<1x8x4xf32>
    %27 = vector.shape_cast %19 : vector<8x4xf32> to vector<1x8x4xf32>
    %28 = vector.shape_cast %20 : vector<8x4xf32> to vector<1x8x4xf32>
    %29 = tpu.concatenate %21, %22, %23, %24, %25, %26, %27, %28 in 0 : vector<1x8x4xf32>, vector<1x8x4xf32>, vector<1x8x4xf32>, vector<1x8x4xf32>, vector<1x8x4xf32>, vector<1x8x4xf32>, vector<1x8x4xf32>, vector<1x8x4xf32> -> vector<8x8x4xf32>
    %30 = arith.truncf %29 : vector<8x8x4xf32> to vector<8x8x4xbf16>
    %31 = vector.extract_strided_slice %11 {offsets = [0, 0], sizes = [8, 4], strides = [1, 1]} : vector<8x32xf32> to vector<8x4xf32>
    %32 = vector.extract_strided_slice %11 {offsets = [0, 4], sizes = [8, 4], strides = [1, 1]} : vector<8x32xf32> to vector<8x4xf32>
    %33 = vector.extract_strided_slice %11 {offsets = [0, 8], sizes = [8, 4], strides = [1, 1]} : vector<8x32xf32> to vector<8x4xf32>
    %34 = vector.extract_strided_slice %11 {offsets = [0, 12], sizes = [8, 4], strides = [1, 1]} : vector<8x32xf32> to vector<8x4xf32>
    %35 = vector.extract_strided_slice %11 {offsets = [0, 16], sizes = [8, 4], strides = [1, 1]} : vector<8x32xf32> to vector<8x4xf32>
    %36 = vector.extract_strided_slice %11 {offsets = [0, 20], sizes = [8, 4], strides = [1, 1]} : vector<8x32xf32> to vector<8x4xf32>
    %37 = vector.extract_strided_slice %11 {offsets = [0, 24], sizes = [8, 4], strides = [1, 1]} : vector<8x32xf32> to vector<8x4xf32>
    %38 = vector.extract_strided_slice %11 {offsets = [0, 28], sizes = [8, 4], strides = [1, 1]} : vector<8x32xf32> to vector<8x4xf32>
    %39 = vector.shape_cast %31 : vector<8x4xf32> to vector<1x8x4xf32>
    %40 = vector.shape_cast %32 : vector<8x4xf32> to vector<1x8x4xf32>
    %41 = vector.shape_cast %33 : vector<8x4xf32> to vector<1x8x4xf32>
    %42 = vector.shape_cast %34 : vector<8x4xf32> to vector<1x8x4xf32>
    %43 = vector.shape_cast %35 : vector<8x4xf32> to vector<1x8x4xf32>
    %44 = vector.shape_cast %36 : vector<8x4xf32> to vector<1x8x4xf32>
    %45 = vector.shape_cast %37 : vector<8x4xf32> to vector<1x8x4xf32>
    %46 = vector.shape_cast %38 : vector<8x4xf32> to vector<1x8x4xf32>
    %47 = tpu.concatenate %39, %40, %41, %42, %43, %44, %45, %46 in 0 : vector<1x8x4xf32>, vector<1x8x4xf32>, vector<1x8x4xf32>, vector<1x8x4xf32>, vector<1x8x4xf32>, vector<1x8x4xf32>, vector<1x8x4xf32>, vector<1x8x4xf32> -> vector<8x8x4xf32>
    %48 = arith.truncf %47 : vector<8x8x4xf32> to vector<8x8x4xbf16>
    %49 = vector.extract_strided_slice %12 {offsets = [0, 0], sizes = [8, 4], strides = [1, 1]} : vector<8x32xf32> to vector<8x4xf32>
    %50 = vector.extract_strided_slice %12 {offsets = [0, 4], sizes = [8, 4], strides = [1, 1]} : vector<8x32xf32> to vector<8x4xf32>
    %51 = vector.extract_strided_slice %12 {offsets = [0, 8], sizes = [8, 4], strides = [1, 1]} : vector<8x32xf32> to vector<8x4xf32>
    %52 = vector.extract_strided_slice %12 {offsets = [0, 12], sizes = [8, 4], strides = [1, 1]} : vector<8x32xf32> to vector<8x4xf32>
    %53 = vector.extract_strided_slice %12 {offsets = [0, 16], sizes = [8, 4], strides = [1, 1]} : vector<8x32xf32> to vector<8x4xf32>
    %54 = vector.extract_strided_slice %12 {offsets = [0, 20], sizes = [8, 4], strides = [1, 1]} : vector<8x32xf32> to vector<8x4xf32>
    %55 = vector.extract_strided_slice %12 {offsets = [0, 24], sizes = [8, 4], strides = [1, 1]} : vector<8x32xf32> to vector<8x4xf32>
    %56 = vector.extract_strided_slice %12 {offsets = [0, 28], sizes = [8, 4], strides = [1, 1]} : vector<8x32xf32> to vector<8x4xf32>
    %57 = vector.shape_cast %49 : vector<8x4xf32> to vector<1x8x4xf32>
    %58 = vector.shape_cast %50 : vector<8x4xf32> to vector<1x8x4xf32>
    %59 = vector.shape_cast %51 : vector<8x4xf32> to vector<1x8x4xf32>
    %60 = vector.shape_cast %52 : vector<8x4xf32> to vector<1x8x4xf32>
    %61 = vector.shape_cast %53 : vector<8x4xf32> to vector<1x8x4xf32>
    %62 = vector.shape_cast %54 : vector<8x4xf32> to vector<1x8x4xf32>
    %63 = vector.shape_cast %55 : vector<8x4xf32> to vector<1x8x4xf32>
    %64 = vector.shape_cast %56 : vector<8x4xf32> to vector<1x8x4xf32>
    %65 = tpu.concatenate %57, %58, %59, %60, %61, %62, %63, %64 in 0 : vector<1x8x4xf32>, vector<1x8x4xf32>, vector<1x8x4xf32>, vector<1x8x4xf32>, vector<1x8x4xf32>, vector<1x8x4xf32>, vector<1x8x4xf32>, vector<1x8x4xf32> -> vector<8x8x4xf32>
    %66 = arith.truncf %65 : vector<8x8x4xf32> to vector<8x8x4xbf16>
    "tpu.trace_start"() <{level = 10 : i32, message = "hqd,hkd->hqk"}> : () -> ()
    %cst_7 = arith.constant dense<0.000000e+00> : vector<8x8x8xf32>
    %67 = tpu.matmul %30, %48, %cst_7 {dimension_numbers = #tpu.dot_dimension_numbers<[2], [2], [1], [1], [0, 0, 0, 1, 1, 1], [0], [0]>} : vector<8x8x4xbf16>, vector<8x8x4xbf16>, vector<8x8x8xf32> -> vector<8x8x8xf32>
    "tpu.trace_stop"() : () -> ()
    %cst_8 = arith.constant dense<0xFF800000> : vector<8x8xf32>
    %68 = vector.multi_reduction <maximumf>, %67, %cst_8 [2] : vector<8x8x8xf32> to vector<8x8xf32>
    %69 = vector.shape_cast %68 : vector<8x8xf32> to vector<8x8x1xf32>
    %70 = vector.broadcast %69 : vector<8x8x1xf32> to vector<8x8x8xf32>
    %71 = arith.subf %67, %70 : vector<8x8x8xf32>
    %72 = math.exp %71 : vector<8x8x8xf32>
    %cst_9 = arith.constant dense<0.000000e+00> : vector<8x8xf32>
    %73 = vector.multi_reduction <add>, %72, %cst_9 [2] : vector<8x8x8xf32> to vector<8x8xf32>
    %74 = vector.shape_cast %73 : vector<8x8xf32> to vector<8x8x1xf32>
    %75 = tpu.reciprocal %74 {approx = true} : vector<8x8x1xf32> -> vector<8x8x1xf32>
    %76 = vector.broadcast %75 : vector<8x8x1xf32> to vector<8x8x8xf32>
    %77 = arith.mulf %72, %76 : vector<8x8x8xf32>
    %78 = arith.truncf %77 : vector<8x8x8xf32> to vector<8x8x8xbf16>
    "tpu.trace_start"() <{level = 10 : i32, message = "hqk,hkd->hqd"}> : () -> ()
    %cst_10 = arith.constant dense<0.000000e+00> : vector<8x8x4xf32>
    %79 = tpu.matmul %78, %66, %cst_10 {dimension_numbers = #tpu.dot_dimension_numbers<[2], [1], [1], [2], [0, 0, 0, 1, 1, 2], [0], [0]>} : vector<8x8x8xbf16>, vector<8x8x4xbf16>, vector<8x8x4xf32> -> vector<8x8x4xf32>
    "tpu.trace_stop"() : () -> ()
    %80 = arith.truncf %79 : vector<8x8x4xf32> to vector<8x8x4xbf16>
    %c0_11 = arith.constant 0 : index
    %c0_12 = arith.constant 0 : index
    %c0_13 = arith.constant 0 : index
    %81 = vector.load %arg4[%c0_11, %c0_12, %c0_13] : memref<8x4x32xbf16, #tpu.memory_space<vmem>>, vector<8x4x32xbf16>
    "tpu.trace_start"() <{level = 10 : i32, message = "hnd,hdc->hnc"}> : () -> ()
    %cst_14 = arith.constant dense<0.000000e+00> : vector<8x8x32xf32>
    %82 = tpu.matmul %80, %81, %cst_14 {dimension_numbers = #tpu.dot_dimension_numbers<[2], [1], [1], [2], [0, 0, 0, 1, 1, 2], [0], [0]>} : vector<8x8x4xbf16>, vector<8x4x32xbf16>, vector<8x8x32xf32> -> vector<8x8x32xf32>
    "tpu.trace_stop"() : () -> ()
    %cst_15 = arith.constant dense<0.000000e+00> : vector<8x32xf32>
    %83 = vector.multi_reduction <add>, %82, %cst_15 [0] : vector<8x8x32xf32> to vector<8x32xf32>
    %c0_16 = arith.constant 0 : index
    %c0_17 = arith.constant 0 : index
    %84 = vector.load %arg5[%c0_16, %c0_17] : memref<1x32xf32, #tpu.memory_space<vmem>>, vector<1x32xf32>
    %85 = vector.broadcast %84 : vector<1x32xf32> to vector<8x32xf32>
    %86 = arith.addf %83, %85 : vector<8x32xf32>
    %c0_18 = arith.constant 0 : index
    %c0_19 = arith.constant 0 : index
    %c0_20 = arith.constant 0 : index
    %87 = vector.load %arg6[%c0_18, %c0_19, %c0_20] : memref<1x8x32xf32, #tpu.memory_space<vmem>>, vector<1x8x32xf32>
    %88 = vector.shape_cast %87 : vector<1x8x32xf32> to vector<8x32xf32>
    %89 = vector.shape_cast %86 : vector<8x32xf32> to vector<1x8x32xf32>
    tpu.vector_store %arg6[%c0_18, %c0_19, %c0_20], %89 {strides = array<i32>} : memref<1x8x32xf32, #tpu.memory_space<vmem>>, vector<1x8x32xf32>,
    return
  }
  func.func @transform_0(%arg0: i32) -> (i32, i32, i32) {
    %c0_i32 = arith.constant 0 : i32
    %c0_i32_0 = arith.constant 0 : i32
    %c0_i32_1 = arith.constant 0 : i32
    return %arg0, %c0_i32, %c0_i32_0 : i32, i32, i32
  }
  func.func @transform_1(%arg0: i32) -> (i32, i32) {
    %c0_i32 = arith.constant 0 : i32
    %c0_i32_0 = arith.constant 0 : i32
    %c0_i32_1 = arith.constant 0 : i32
    return %c0_i32, %c0_i32_0 : i32, i32
  }
  func.func @transform_2(%arg0: i32) -> (i32, i32) {
    %c0_i32 = arith.constant 0 : i32
    %c0_i32_0 = arith.constant 0 : i32
    %c0_i32_1 = arith.constant 0 : i32
    return %c0_i32, %c0_i32_0 : i32, i32
  }
  func.func @transform_3(%arg0: i32) -> (i32, i32, i32) {
    %c0_i32 = arith.constant 0 : i32
    %c0_i32_0 = arith.constant 0 : i32
    %c0_i32_1 = arith.constant 0 : i32
    %c0_i32_2 = arith.constant 0 : i32
    return %c0_i32, %c0_i32_0, %c0_i32_1 : i32, i32, i32
  }
  func.func @transform_4(%arg0: i32) -> (i32, i32) {
    %c0_i32 = arith.constant 0 : i32
    %c0_i32_0 = arith.constant 0 : i32
    %c0_i32_1 = arith.constant 0 : i32
    return %c0_i32, %c0_i32_0 : i32, i32
  }
  func.func @transform_5(%arg0: i32) -> (i32, i32, i32) {
    %c0_i32 = arith.constant 0 : i32
    %c0_i32_0 = arith.constant 0 : i32
    %c0_i32_1 = arith.constant 0 : i32
    return %arg0, %c0_i32, %c0_i32_0 : i32, i32, i32
  }
}

</mosaic_0001>

<llo_original>
// kernel: tpu_custom_call.1
$region0: #{tpu_custom_call.1}
  #allocation0 [shape = 'u32[]', space=smem, size = 0x4, offset = 0x4, fixed_abs, tag = 'smem constant byte address 0x4 - core index']
  #allocation1 [shape = 'u32[144,128]{1,0:T(1,128)}', space=vmem, size = 0x12000, scoped, tag = 'internal scratch']
  %s0 = inlined_call_operand.hbm [shape: f32[2,8,32], index: 0, kind: input, shape index: {}]
  %s1 = inlined_call_operand.hbm [shape: bf16[32,96], index: 1, kind: input, shape index: {}]
  %s2 = inlined_call_operand.vmem [shape: f32[1,96], index: 2, kind: input, shape index: {}]
  %s3 = inlined_call_operand.hbm [shape: bf16[8,4,32], index: 3, kind: input, shape index: {}]
  %s4 = inlined_call_operand.vmem [shape: f32[1,32], index: 4, kind: input, shape index: {}]
  %s5 = inlined_call_operand.hbm [shape: f32[2,8,32], index: 5, kind: output, shape index: {}]
  %s6 = sld [smem:[#allocation0]]
  $region65: #{tpu_custom_call.1} parent=0
    _
  %s8 = ssub.s32 1, %s6
  %s9 = scalar_select 0, %s8, %s6
  $region1: #{tpu_custom_call.1} parent=0
    #allocation2 [shape = 'u8[8192]{0}', space=vmem, size = 0x2000, scoped, tag = 'input window, operand 0']
    #allocation3 [shape = 's32[2]{0}', space=sflag, size = 0x8, scoped, tag = 'scoped memory for tpu_custom_call.1']
    #allocation4 [shape = 's32[2]{0}', space=sflag, size = 0x8, scoped, tag = 'scoped memory for tpu_custom_call.1']
    #allocation5 [shape = 'u8[8192]{0}', space=vmem, size = 0x2000, scoped, tag = 'input window, operand 1, single buffered']
    #allocation6 [shape = 's32[1]{0}', space=sflag, size = 0x4, scoped, tag = 'scoped memory for tpu_custom_call.1']
    #allocation7 [shape = 'u8[8192]{0}', space=vmem, size = 0x2000, scoped, tag = 'input window, operand 3, single buffered']
    #allocation8 [shape = 'u8[8192]{0}', space=vmem, size = 0x2000, scoped, tag = 'output window, operand 0']
    %10 = vsyncpa [#allocation3], 0
    %s11 = scalar_lea.sflag [#allocation3], 1
    %12 = vsyncpa %s11, 0
    %13 = vsyncpa [#allocation6], 0
    %14 = vsyncpa [#allocation4], 0
    %s15 = scalar_lea.sflag [#allocation4], 1
    %16 = vsyncpa %s15, 0
    loop: start=0, step=1, limit=4
    $region2: #{tpu_custom_call.1} parent=1 // loop_pre_header
      _
    $region3: #{tpu_custom_call.1} parent=1 // loop_header
      %s18 = sphi 0, %s22
      %p19 = scmp.ge.s32.totalorder %s18, 4
      %s28 = sphi 0, %s30
      %s31 = sphi 0, %s28
      %s32 = sphi 0, %s31
      %s48 = sphi 0, %s32
      %s52 = sphi 0, %s52
      %s54 = sphi 0, %s52
      %s55 = sphi 0, %s54
      %s69 = sphi 0, %s55
      %s73 = sphi 0, %s73
      %s75 = sphi 0, %s73
      %s76 = sphi 0, %s75
      %s90 = sphi 0, %s76
      %s94 = sphi 0, %s94
      %s96 = sphi 0, %s94
      %s97 = sphi 0, %s96
      %s111 = sphi 0, %s97
      %s115 = sphi 0, %s115
      %s117 = sphi 0, %s115
      %s118 = sphi 0, %s117
      %s132 = sphi 0, %s118
      %s138 = sphi 0, %s140
      %s141 = sphi 0, %s138
      %s142 = sphi 0, %s141
      %s158 = sphi 0, %s142
    $region4: #{tpu_custom_call.1} parent=1 // loop_header_branch
      %21 = sbr.rel (%p19) target = $region8
    $region5: #{tpu_custom_call.1} parent=1 // loop_body
      %s23 = ssub.s32 %s18, 1
      %s24 = ssub.s32 %s18, 2
      %s25 = sadd.s32 %s18, 1
      %s26 = ssub.s32 %s18, %s25
      %p27 = scmp.eq.s32.totalorder %s26, 0
      %s29 = sadd.s32 %s28, 1
      %s30 = scalar_select %p27, %s28, %s29
      %p33 = pneg %p27
      %p34 = scmp.eq.s32.totalorder %s18, 1
      %p35 = por %p33, %p34
      %p36 = scmp.ne.s32.totalorder %s28, %s31
      %p37 = scmp.eq.s32.totalorder %s18, 0
      %p38 = por %p36, %p37
      %p39 = scmp.ne.s32.totalorder %s28, %s31
      %p40 = scmp.eq.s32.totalorder %s23, 1
      %p41 = por %p39, %p40
      %p42 = scmp.ne.s32.totalorder %s31, %s32
      %p43 = scmp.eq.s32.totalorder %s23, 0
      %p44 = por %p42, %p43
      %p45 = scmp.ne.s32.totalorder %s31, %s32
      %p46 = scmp.eq.s32.totalorder %s24, 1
      %p47 = por %p45, %p46
      %p49 = scmp.ne.s32.totalorder %s32, %s48
      %p50 = scmp.eq.s32.totalorder %s24, 0
      %p51 = por %p49, %p50
      %s53 = sadd.s32 %s52, 1
      %p56 = scmp.eq.s32.totalorder %s18, 1
      %p57 = scmp.ne.s32.totalorder %s52, %s54
      %p58 = scmp.eq.s32.totalorder %s18, 0
      %p59 = por %p57, %p58
      %p60 = scmp.ne.s32.totalorder %s52, %s54
      %p61 = scmp.eq.s32.totalorder %s23, 1
      %p62 = por %p60, %p61
      %p63 = scmp.ne.s32.totalorder %s54, %s55
      %p64 = scmp.eq.s32.totalorder %s23, 0
      %p65 = por %p63, %p64
      %p66 = scmp.ne.s32.totalorder %s54, %s55
      %p67 = scmp.eq.s32.totalorder %s24, 1
      %p68 = por %p66, %p67
      %p70 = scmp.ne.s32.totalorder %s55, %s69
      %p71 = scmp.eq.s32.totalorder %s24, 0
      %p72 = por %p70, %p71
      %s74 = sadd.s32 %s73, 1
      %p77 = scmp.eq.s32.totalorder %s18, 1
      %p78 = scmp.ne.s32.totalorder %s73, %s75
      %p79 = scmp.eq.s32.totalorder %s18, 0
      %p80 = por %p78, %p79
      %p81 = scmp.ne.s32.totalorder %s73, %s75
      %p82 = scmp.eq.s32.totalorder %s23, 1
      %p83 = por %p81, %p82
      %p84 = scmp.ne.s32.totalorder %s75, %s76
      %p85 = scmp.eq.s32.totalorder %s23, 0
      %p86 = por %p84, %p85
      %p87 = scmp.ne.s32.totalorder %s75, %s76
      %p88 = scmp.eq.s32.totalorder %s24, 1
      %p89 = por %p87, %p88
      %p91 = scmp.ne.s32.totalorder %s76, %s90
      %p92 = scmp.eq.s32.totalorder %s24, 0
      %p93 = por %p91, %p92
      %s95 = sadd.s32 %s94, 1
      %p98 = scmp.eq.s32.totalorder %s18, 1
      %p99 = scmp.ne.s32.totalorder %s94, %s96
      %p100 = scmp.eq.s32.totalorder %s18, 0
      %p101 = por %p99, %p100
      %p102 = scmp.ne.s32.totalorder %s94, %s96
      %p103 = scmp.eq.s32.totalorder %s23, 1
      %p104 = por %p102, %p103
      %p105 = scmp.ne.s32.totalorder %s96, %s97
      %p106 = scmp.eq.s32.totalorder %s23, 0
      %p107 = por %p105, %p106
      %p108 = scmp.ne.s32.totalorder %s96, %s97
      %p109 = scmp.eq.s32.totalorder %s24, 1
      %p110 = por %p108, %p109
      %p112 = scmp.ne.s32.totalorder %s97, %s111
      %p113 = scmp.eq.s32.totalorder %s24, 0
      %p114 = por %p112, %p113
      %s116 = sadd.s32 %s115, 1
      %p119 = scmp.eq.s32.totalorder %s18, 1
      %p120 = scmp.ne.s32.totalorder %s115, %s117
      %p121 = scmp.eq.s32.totalorder %s18, 0
      %p122 = por %p120, %p121
      %p123 = scmp.ne.s32.totalorder %s115, %s117
      %p124 = scmp.eq.s32.totalorder %s23, 1
      %p125 = por %p123, %p124
      %p126 = scmp.ne.s32.totalorder %s117, %s118
      %p127 = scmp.eq.s32.totalorder %s23, 0
      %p128 = por %p126, %p127
      %p129 = scmp.ne.s32.totalorder %s117, %s118
      %p130 = scmp.eq.s32.totalorder %s24, 1
      %p131 = por %p129, %p130
      %p133 = scmp.ne.s32.totalorder %s118, %s132
      %p134 = scmp.eq.s32.totalorder %s24, 0
      %p135 = por %p133, %p134
      %s136 = ssub.s32 %s18, %s25
      %p137 = scmp.eq.s32.totalorder %s136, 0
      %s139 = sadd.s32 %s138, 1
      %s140 = scalar_select %p137, %s138, %s139
      %p143 = pneg %p137
      %p144 = scmp.eq.s32.totalorder %s18, 1
      %p145 = por %p143, %p144
      %p146 = scmp.ne.s32.totalorder %s138, %s141
      %p147 = scmp.eq.s32.totalorder %s18, 0
      %p148 = por %p146, %p147
      %p149 = scmp.ne.s32.totalorder %s138, %s141
      %p150 = scmp.eq.s32.totalorder %s23, 1
      %p151 = por %p149, %p150
      %p152 = scmp.ne.s32.totalorder %s141, %s142
      %p153 = scmp.eq.s32.totalorder %s23, 0
      %p154 = por %p152, %p153
      %p155 = scmp.ne.s32.totalorder %s141, %s142
      %p156 = scmp.eq.s32.totalorder %s24, 1
      %p157 = por %p155, %p156
      %p159 = scmp.ne.s32.totalorder %s142, %s158
      %p160 = scmp.eq.s32.totalorder %s24, 0
      %p161 = por %p159, %p160
      %p162 = scmp.le.s32.totalorder 1, %s18
      %p163 = scmp.lt.s32.totalorder %s18, 3
      %p164 = pnand %p162, %p163
      %p165 = pneg %p164
      // Predicated region
      $region9: #{tpu_custom_call.1} parent=5 // pred_check
        _
      $region10: #{tpu_custom_call.1} parent=5 // pred_check_branch
        %167 = sbr.rel (%p164) target = $region12
      $region11: #{tpu_custom_call.1} parent=5 // pred_region
        %s168 = ssub.s32 %s18, 1
        // Predicated region
        $region13: #{tpu_custom_call.1} parent=11 // pred_check
          %p169 = pneg %p65
        $region14: #{tpu_custom_call.1} parent=11 // pred_check_branch
          %171 = sbr.rel (%p169) target = $region16
        $region15: #{tpu_custom_call.1} parent=11 // pred_region
          %s173 = ssub.s32 256, 256
          %174 = vsyncadd [#allocation6], %s173
          %s175 = sshll.u32 [#allocation5], 4
          %s176 = int_to_ptr.vmem [resolvable:$true] %s175
          %181 = dma.hbm_to_vmem [thread:$0]  %s1, 256, %s176, [#allocation6], 64, 64, 4
        $region16: #{tpu_custom_call.1} parent=11 // pred_fallthru
          _
        // Predicated region
        $region17: #{tpu_custom_call.1} parent=11 // pred_check
          %p182 = pneg %p86
        $region18: #{tpu_custom_call.1} parent=11 // pred_check_branch
          %184 = sbr.rel (%p182) target = $region20
        $region19: #{tpu_custom_call.1} parent=11 // pred_region
          _
        $region20: #{tpu_custom_call.1} parent=11 // pred_fallthru
          _
        // Predicated region
        $region21: #{tpu_custom_call.1} parent=11 // pred_check
          %p185 = pneg %p107
        $region22: #{tpu_custom_call.1} parent=11 // pred_check_branch
          %187 = sbr.rel (%p185) target = $region24
        $region23: #{tpu_custom_call.1} parent=11 // pred_region
          %s189 = ssub.s32 256, 256
          %190 = vsyncadd [#allocation6], %s189
          %s191 = sshll.u32 [#allocation7], 4
          %s192 = int_to_ptr.vmem [resolvable:$true] %s191
          %197 = dma.hbm_to_vmem [thread:$0]  %s3, 256, %s192, [#allocation6], 32, 32, 2
        $region24: #{tpu_custom_call.1} parent=11 // pred_fallthru
          _
        // Predicated region
        $region25: #{tpu_custom_call.1} parent=11 // pred_check
          %p198 = pneg %p128
        $region26: #{tpu_custom_call.1} parent=11 // pred_check_branch
          %200 = sbr.rel (%p198) target = $region28
        $region27: #{tpu_custom_call.1} parent=11 // pred_region
          _
        $region28: #{tpu_custom_call.1} parent=11 // pred_fallthru
          _
      $region12: #{tpu_custom_call.1} parent=5 // pred_fallthru
        _
      %p201 = scmp.lt.s32.totalorder %s18, 2
      // Predicated region
      $region29: #{tpu_custom_call.1} parent=5 // pred_check
        %p202 = pneg %p201
      $region30: #{tpu_custom_call.1} parent=5 // pred_check_branch
        %204 = sbr.rel (%p202) target = $region32
      $region31: #{tpu_custom_call.1} parent=5 // pred_region
        // Predicated region
        $region33: #{tpu_custom_call.1} parent=31 // pred_check
          %p205 = pneg %p38
        $region34: #{tpu_custom_call.1} parent=31 // pred_check_branch
          %207 = sbr.rel (%p205) target = $region36
        $region35: #{tpu_custom_call.1} parent=31 // pred_region
          %s208 = sand.u32 %s28, 1
          %s209 = scalar_lea.sflag [#allocation3], %s208
          %s210 = sand.u32 %s28, 1
          %s211 = smul.addr %s210, 8
          %s212 = scalar_lea.vmem [#allocation2], %s211
          %s214 = ssub.s32 128, 128
          %215 = vsyncadd %s209, %s214
          %s216 = smul.addr %s18, 128
          %s217 = scalar_lea.hbm %s0, %s216
          %s219 = sshll.u32 %s212, 4
          %s220 = int_to_ptr.vmem [resolvable:$true] %s219
          %222 = dma.hbm_to_vmem [thread:$0]  %s217, 128, %s220, %s209
        $region36: #{tpu_custom_call.1} parent=31 // pred_fallthru
          _
      $region32: #{tpu_custom_call.1} parent=5 // pred_fallthru
        _
      %p223 = scmp.le.s32.totalorder 1, %s18
      %p224 = scmp.lt.s32.totalorder %s18, 3
      %p225 = pnand %p223, %p224
      %p226 = pneg %p225
      // Predicated region
      $region37: #{tpu_custom_call.1} parent=5 // pred_check
        _
      $region38: #{tpu_custom_call.1} parent=5 // pred_check_branch
        %228 = sbr.rel (%p225) target = $region40
      $region39: #{tpu_custom_call.1} parent=5 // pred_region
        %s229 = ssub.s32 %s18, 1
        %s230 = sand.u32 %s31, 1
        %s231 = scalar_lea.sflag [#allocation3], %s230
        %s232 = sand.u32 %s31, 1
        %s233 = smul.addr %s232, 8
        %s234 = scalar_lea.vmem [#allocation2], %s233
        // Predicated region
        $region41: #{tpu_custom_call.1} parent=39 // pred_check
          %p235 = pneg %p44
        $region42: #{tpu_custom_call.1} parent=39 // pred_check_branch
          %237 = sbr.rel (%p235) target = $region44
        $region43: #{tpu_custom_call.1} parent=39 // pred_region
          %238 = dma.done %s231, 128
        $region44: #{tpu_custom_call.1} parent=39 // pred_fallthru
          _
        // Predicated region
        $region45: #{tpu_custom_call.1} parent=39 // pred_check
          %p239 = pneg %p65
        $region46: #{tpu_custom_call.1} parent=39 // pred_check_branch
          %241 = sbr.rel (%p239) target = $region48
        $region47: #{tpu_custom_call.1} parent=39 // pred_region
          %242 = dma.done [#allocation6], 256
        $region48: #{tpu_custom_call.1} parent=39 // pred_fallthru
          _
        // Predicated region
        $region49: #{tpu_custom_call.1} parent=39 // pred_check
          %p243 = pneg %p107
        $region50: #{tpu_custom_call.1} parent=39 // pred_check_branch
          %245 = sbr.rel (%p243) target = $region52
        $region51: #{tpu_custom_call.1} parent=39 // pred_region
          %246 = dma.done [#allocation6], 256
        $region52: #{tpu_custom_call.1} parent=39 // pred_fallthru
          _
        %s247 = sand.u32 %s31, 1
        %s248 = scalar_lea.sflag [#allocation3], %s247
        %s249 = sand.u32 %s31, 1
        %s250 = smul.addr %s249, 8
        %s251 = scalar_lea.vmem [#allocation2], %s250
        %p252 = pneg %p44
        %p253 = pneg %p41
        %p254 = pneg %p65
        %p255 = pneg %p62
        %p256 = pneg %p86
        %p257 = pneg %p83
        %p258 = pneg %p107
        %p259 = pneg %p104
        %p260 = pneg %p128
        %p261 = pneg %p125
        %p262 = pneg %p154
        %p263 = pneg %p151
        %s264 = sand.u32 %s141, 1
        %s265 = scalar_lea.sflag [#allocation4], %s264
        %s266 = sand.u32 %s141, 1
        %s267 = smul.addr %s266, 8
        %s268 = scalar_lea.vmem [#allocation8], %s267
        %v270 = vld [vmem:[%s234] sm:$0xff]
        %v271 = vpack.c.bf16 %v270, %v270
        %v272 = vld [vmem:[#allocation5] sm:$0xf]
        %v273 = vld [vmem:[#allocation5 + $0x4] sm:$0xf]
        %v274 = vld [vmem:[#allocation5 + $0x8] sm:$0xf]
        %v275 = vld [vmem:[#allocation5 + $0xc] sm:$0xf]
        %v276 = vld [vmem:[%s2] sm:$0x1]
        %v278 = vlaneseq
        %v279 = vshrl.u32 %v278, 7
        %v280 = vsub.s32 0, %v279
        %v281 = vrot.slane %v276, %v280
        %v287 = vunpack.c.l.b16 %v272
        %v288 = vunpack.c.l.b16 %v273
        %v289 = vunpack.c.l.b16 %v274
        %v290 = vunpack.c.l.b16 %v275
        %v291 = vpack.c.b16 %v288, %v287
        %v292 = vpack.c.b16 %v290, %v289
        %vm295 = vcmask 261120
        %v297 = vsel %vm295, %v271, 0
        %299 = vmatprep.subr.bf16.mxu0 0
        %300 = vmatpush1.bf16.msra.mxu0 %v291
        %301 = vmatprep.subr.bf16.mxu0 0
        %302 = vmatpush1.bf16.msra.mxu0 %v292
        %303 = vmatprep.subr.bf16.mxu0 0
        %304 = vmatpush1.bf16.msra.mxu0 0
        %305 = vmatprep.subr.bf16.mxu0 0
        %306 = vmatpush1.bf16.msra.mxu0 0
        %307 = vmatprep.subr.bf16.mxu0 0
        %308 = vmatpush1.bf16.msra.mxu0 0
        %309 = vmatprep.subr.bf16.mxu0 0
        %310 = vmatpush1.bf16.msra.mxu0 0
        %311 = vmatprep.subr.bf16.mxu0 0
        %312 = vmatpush1.bf16.msra.mxu0 0
        %313 = vmatprep.subr.bf16.mxu0 0
        %314 = vmatpush1.bf16.msra.mxu0 0
        %315 = vmatprep.subr.bf16.mxu0 0
        %316 = vmatpush1.bf16.msra.mxu0 0
        %317 = vmatprep.subr.bf16.mxu0 0
        %318 = vmatpush1.bf16.msra.mxu0 0
        %319 = vmatprep.subr.bf16.mxu0 0
        %320 = vmatpush1.bf16.msra.mxu0 0
        %321 = vmatprep.subr.bf16.mxu0 0
        %322 = vmatpush1.bf16.msra.mxu0 0
        %323 = vmatprep.subr.bf16.mxu0 0
        %324 = vmatpush1.bf16.msra.mxu0 0
        %325 = vmatprep.subr.bf16.mxu0 0
        %326 = vmatpush1.bf16.msra.mxu0 0
        %327 = vmatprep.subr.bf16.mxu0 0
        %328 = vmatpush1.bf16.msra.mxu0 0
        %329 = vmatprep.subr.bf16.mxu0 0
        %330 = vmatpush1.bf16.msra.mxu0 0
        %331 = vmatprep.mubr.bf16.mxu0 0
        %332 = vmatmul.mubr.bf16.gmra.mrb[0].mxu0 %v297
        %v333 = vpop.f32.mrb[0].mxu0
        %v334 = vadd.f32 %v281, %v333
        %v335 = vpop.f32.mrb[0].mxu0
        %v336 = vpop.f32.mrb[0].mxu0
        %v337 = vpop.f32.mrb[0].mxu0
        %338 = vdwg.mxu0
        %v339 = vmul.f32 %v334, 0.5
        %341 = vrot.lane.b32.xlu0 %v339, 124
        %v342 = vpop.permute.xlu0 %341
        %344 = vrot.lane.b32.xlu0 %v339, 120
        %v345 = vpop.permute.xlu0 %344
        %347 = vrot.lane.b32.xlu0 %v339, 116
        %v348 = vpop.permute.xlu0 %347
        %350 = vrot.lane.b32.xlu0 %v339, 112
        %v351 = vpop.permute.xlu0 %350
        %353 = vrot.lane.b32.xlu0 %v339, 108
        %v354 = vpop.permute.xlu0 %353
        %356 = vrot.lane.b32.xlu0 %v339, 104
        %v357 = vpop.permute.xlu0 %356
        %359 = vrot.lane.b32.xlu0 %v339, 100
        %v360 = vpop.permute.xlu0 %359
        %v362 = vpack.c.bf16 %v339, %v339
        %v363 = vpack.c.bf16 %v342, %v342
        %v364 = vpack.c.bf16 %v345, %v345
        %v365 = vpack.c.bf16 %v348, %v348
        %v366 = vpack.c.bf16 %v351, %v351
        %v367 = vpack.c.bf16 %v354, %v354
        %v368 = vpack.c.bf16 %v357, %v357
        %v369 = vpack.c.bf16 %v360, %v360
        %371 = vrot.lane.b32.xlu0 %v334, 124
        %v372 = vpop.permute.xlu0 %371
        %374 = vrot.lane.b32.xlu0 %v334, 120
        %v375 = vpop.permute.xlu0 %374
        %377 = vrot.lane.b32.xlu0 %v334, 116
        %v378 = vpop.permute.xlu0 %377
        %380 = vrot.lane.b32.xlu0 %v334, 112
        %v381 = vpop.permute.xlu0 %380
        %383 = vrot.lane.b32.xlu0 %v334, 108
        %v384 = vpop.permute.xlu0 %383
        %386 = vrot.lane.b32.xlu0 %v334, 104
        %v387 = vpop.permute.xlu0 %386
        %389 = vrot.lane.b32.xlu0 %v334, 100
        %v390 = vpop.permute.xlu0 %389
        %v392 = vpack.c.bf16 %v334, %v334
        %v393 = vpack.c.bf16 %v372, %v372
        %v394 = vpack.c.bf16 %v375, %v375
        %v395 = vpack.c.bf16 %v378, %v378
        %v396 = vpack.c.bf16 %v381, %v381
        %v397 = vpack.c.bf16 %v384, %v384
        %v398 = vpack.c.bf16 %v387, %v387
        %v399 = vpack.c.bf16 %v390, %v390
        %401 = vrot.lane.b32.xlu0 %v392, 96
        %v402 = vpop.permute.xlu0 %401
        %vm403 = vcmask 31744
        %v405 = vsel %vm403, %v362, 0
        %v408 = vsel %vm403, %v402, 0
        %410 = vmatprep.subr.bf16.mxu0 0
        %411 = vmatpush1.bf16.xpose.msra.mxu0 %v408
        %412 = vmatprep.subr.bf16.mxu0 0
        %413 = vmatpush1.bf16.xpose.msra.mxu0 0
        %414 = vmatprep.subr.bf16.mxu0 0
        %415 = vmatpush1.bf16.xpose.msra.mxu0 0
        %416 = vmatprep.subr.bf16.mxu0 0
        %417 = vmatpush1.bf16.xpose.msra.mxu0 0
        %418 = vmatprep.subr.bf16.mxu0 0
        %419 = vmatpush1.bf16.xpose.msra.mxu0 0
        %420 = vmatprep.subr.bf16.mxu0 0
        %421 = vmatpush1.bf16.xpose.msra.mxu0 0
        %422 = vmatprep.subr.bf16.mxu0 0
        %423 = vmatpush1.bf16.xpose.msra.mxu0 0
        %424 = vmatprep.subr.bf16.mxu0 0
        %425 = vmatpush1.bf16.xpose.msra.mxu0 0
        %426 = vmatprep.subr.bf16.mxu0 0
        %427 = vmatpush1.bf16.xpose.msra.mxu0 0
        %428 = vmatprep.subr.bf16.mxu0 0
        %429 = vmatpush1.bf16.xpose.msra.mxu0 0
        %430 = vmatprep.subr.bf16.mxu0 0
        %431 = vmatpush1.bf16.xpose.msra.mxu0 0
        %432 = vmatprep.subr.bf16.mxu0 0
        %433 = vmatpush1.bf16.xpose.msra.mxu0 0
        %434 = vmatprep.subr.bf16.mxu0 0
        %435 = vmatpush1.bf16.xpose.msra.mxu0 0
        %436 = vmatprep.subr.bf16.mxu0 0
        %437 = vmatpush1.bf16.xpose.msra.mxu0 0
        %438 = vmatprep.subr.bf16.mxu0 0
        %439 = vmatpush1.bf16.xpose.msra.mxu0 0
        %440 = vmatprep.subr.bf16.mxu0 0
        %441 = vmatpush1.bf16.xpose.msra.mxu0 0
        %442 = vmatprep.mubr.bf16.mxu0 0
        %443 = vmatmul.mubr.bf16.gmra.mrb[0].mxu0 %v405
        %v444 = vpop.f32.mrb[0].mxu0
        %v445 = vadd.f32 0.0, %v444
        %v446 = vpop.f32.mrb[0].mxu0
        %v447 = vpop.f32.mrb[0].mxu0
        %v448 = vpop.f32.mrb[0].mxu0
        %449 = vdwg.mxu0
        %451 = vrot.lane.b32.xlu0 %v393, 96
        %v452 = vpop.permute.xlu0 %451
        %v454 = vsel %vm403, %v363, 0
        %v457 = vsel %vm403, %v452, 0
        %459 = vmatprep.subr.bf16.mxu0 0
        %460 = vmatpush1.bf16.xpose.msra.mxu0 %v457
        %461 = vmatprep.subr.bf16.mxu0 0
        %462 = vmatpush1.bf16.xpose.msra.mxu0 0
        %463 = vmatprep.subr.bf16.mxu0 0
        %464 = vmatpush1.bf16.xpose.msra.mxu0 0
        %465 = vmatprep.subr.bf16.mxu0 0
        %466 = vmatpush1.bf16.xpose.msra.mxu0 0
        %467 = vmatprep.subr.bf16.mxu0 0
        %468 = vmatpush1.bf16.xpose.msra.mxu0 0
        %469 = vmatprep.subr.bf16.mxu0 0
        %470 = vmatpush1.bf16.xpose.msra.mxu0 0
        %471 = vmatprep.subr.bf16.mxu0 0
        %472 = vmatpush1.bf16.xpose.msra.mxu0 0
        %473 = vmatprep.subr.bf16.mxu0 0
        %474 = vmatpush1.bf16.xpose.msra.mxu0 0
        %475 = vmatprep.subr.bf16.mxu0 0
        %476 = vmatpush1.bf16.xpose.msra.mxu0 0
        %477 = vmatprep.subr.bf16.mxu0 0
        %478 = vmatpush1.bf16.xpose.msra.mxu0 0
        %479 = vmatprep.subr.bf16.mxu0 0
        %480 = vmatpush1.bf16.xpose.msra.mxu0 0
        %481 = vmatprep.subr.bf16.mxu0 0
        %482 = vmatpush1.bf16.xpose.msra.mxu0 0
        %483 = vmatprep.subr.bf16.mxu0 0
        %484 = vmatpush1.bf16.xpose.msra.mxu0 0
        %485 = vmatprep.subr.bf16.mxu0 0
        %486 = vmatpush1.bf16.xpose.msra.mxu0 0
        %487 = vmatprep.subr.bf16.mxu0 0
        %488 = vmatpush1.bf16.xpose.msra.mxu0 0
        %489 = vmatprep.subr.bf16.mxu0 0
        %490 = vmatpush1.bf16.xpose.msra.mxu0 0
        %491 = vmatprep.mubr.bf16.mxu0 0
        %492 = vmatmul.mubr.bf16.gmra.mrb[0].mxu0 %v454
        %v493 = vpop.f32.mrb[0].mxu0
        %v494 = vadd.f32 0.0, %v493
        %v495 = vpop.f32.mrb[0].mxu0
        %v496 = vpop.f32.mrb[0].mxu0
        %v497 = vpop.f32.mrb[0].mxu0
        %498 = vdwg.mxu0
        %500 = vrot.lane.b32.xlu0 %v394, 96
        %v501 = vpop.permute.xlu0 %500
        %v503 = vsel %vm403, %v364, 0
        %v506 = vsel %vm403, %v501, 0
        %508 = vmatprep.subr.bf16.mxu0 0
        %509 = vmatpush1.bf16.xpose.msra.mxu0 %v506
        %510 = vmatprep.subr.bf16.mxu0 0
        %511 = vmatpush1.bf16.xpose.msra.mxu0 0
        %512 = vmatprep.subr.bf16.mxu0 0
        %513 = vmatpush1.bf16.xpose.msra.mxu0 0
        %514 = vmatprep.subr.bf16.mxu0 0
        %515 = vmatpush1.bf16.xpose.msra.mxu0 0
        %516 = vmatprep.subr.bf16.mxu0 0
        %517 = vmatpush1.bf16.xpose.msra.mxu0 0
        %518 = vmatprep.subr.bf16.mxu0 0
        %519 = vmatpush1.bf16.xpose.msra.mxu0 0
        %520 = vmatprep.subr.bf16.mxu0 0
        %521 = vmatpush1.bf16.xpose.msra.mxu0 0
        %522 = vmatprep.subr.bf16.mxu0 0
        %523 = vmatpush1.bf16.xpose.msra.mxu0 0
        %524 = vmatprep.subr.bf16.mxu0 0
        %525 = vmatpush1.bf16.xpose.msra.mxu0 0
        %526 = vmatprep.subr.bf16.mxu0 0
        %527 = vmatpush1.bf16.xpose.msra.mxu0 0
        %528 = vmatprep.subr.bf16.mxu0 0
        %529 = vmatpush1.bf16.xpose.msra.mxu0 0
        %530 = vmatprep.subr.bf16.mxu0 0
        %531 = vmatpush1.bf16.xpose.msra.mxu0 0
        %532 = vmatprep.subr.bf16.mxu0 0
        %533 = vmatpush1.bf16.xpose.msra.mxu0 0
        %534 = vmatprep.subr.bf16.mxu0 0
        %535 = vmatpush1.bf16.xpose.msra.mxu0 0
        %536 = vmatprep.subr.bf16.mxu0 0
        %537 = vmatpush1.bf16.xpose.msra.mxu0 0
        %538 = vmatprep.subr.bf16.mxu0 0
        %539 = vmatpush1.bf16.xpose.msra.mxu0 0
        %540 = vmatprep.mubr.bf16.mxu0 0
        %541 = vmatmul.mubr.bf16.gmra.mrb[0].mxu0 %v503
        %v542 = vpop.f32.mrb[0].mxu0
        %v543 = vadd.f32 0.0, %v542
        %v544 = vpop.f32.mrb[0].mxu0
        %v545 = vpop.f32.mrb[0].mxu0
        %v546 = vpop.f32.mrb[0].mxu0
        %547 = vdwg.mxu0
        %549 = vrot.lane.b32.xlu0 %v395, 96
        %v550 = vpop.permute.xlu0 %549
        %v552 = vsel %vm403, %v365, 0
        %v555 = vsel %vm403, %v550, 0
        %557 = vmatprep.subr.bf16.mxu0 0
        %558 = vmatpush1.bf16.xpose.msra.mxu0 %v555
        %559 = vmatprep.subr.bf16.mxu0 0
        %560 = vmatpush1.bf16.xpose.msra.mxu0 0
        %561 = vmatprep.subr.bf16.mxu0 0
        %562 = vmatpush1.bf16.xpose.msra.mxu0 0
        %563 = vmatprep.subr.bf16.mxu0 0
        %564 = vmatpush1.bf16.xpose.msra.mxu0 0
        %565 = vmatprep.subr.bf16.mxu0 0
        %566 = vmatpush1.bf16.xpose.msra.mxu0 0
        %567 = vmatprep.subr.bf16.mxu0 0
        %568 = vmatpush1.bf16.xpose.msra.mxu0 0
        %569 = vmatprep.subr.bf16.mxu0 0
        %570 = vmatpush1.bf16.xpose.msra.mxu0 0
        %571 = vmatprep.subr.bf16.mxu0 0
        %572 = vmatpush1.bf16.xpose.msra.mxu0 0
        %573 = vmatprep.subr.bf16.mxu0 0
        %574 = vmatpush1.bf16.xpose.msra.mxu0 0
        %575 = vmatprep.subr.bf16.mxu0 0
        %576 = vmatpush1.bf16.xpose.msra.mxu0 0
        %577 = vmatprep.subr.bf16.mxu0 0
        %578 = vmatpush1.bf16.xpose.msra.mxu0 0
        %579 = vmatprep.subr.bf16.mxu0 0
        %580 = vmatpush1.bf16.xpose.msra.mxu0 0
        %581 = vmatprep.subr.bf16.mxu0 0
        %582 = vmatpush1.bf16.xpose.msra.mxu0 0
        %583 = vmatprep.subr.bf16.mxu0 0
        %584 = vmatpush1.bf16.xpose.msra.mxu0 0
        %585 = vmatprep.subr.bf16.mxu0 0
        %586 = vmatpush1.bf16.xpose.msra.mxu0 0
        %587 = vmatprep.subr.bf16.mxu0 0
        %588 = vmatpush1.bf16.xpose.msra.mxu0 0
        %589 = vmatprep.mubr.bf16.mxu0 0
        %590 = vmatmul.mubr.bf16.gmra.mrb[0].mxu0 %v552
        %v591 = vpop.f32.mrb[0].mxu0
        %v592 = vadd.f32 0.0, %v591
        %v593 = vpop.f32.mrb[0].mxu0
        %v594 = vpop.f32.mrb[0].mxu0
        %v595 = vpop.f32.mrb[0].mxu0
        %596 = vdwg.mxu0
        %598 = vrot.lane.b32.xlu0 %v396, 96
        %v599 = vpop.permute.xlu0 %598
        %v601 = vsel %vm403, %v366, 0
        %v604 = vsel %vm403, %v599, 0
        %606 = vmatprep.subr.bf16.mxu0 0
        %607 = vmatpush1.bf16.xpose.msra.mxu0 %v604
        %608 = vmatprep.subr.bf16.mxu0 0
        %609 = vmatpush1.bf16.xpose.msra.mxu0 0
        %610 = vmatprep.subr.bf16.mxu0 0
        %611 = vmatpush1.bf16.xpose.msra.mxu0 0
        %612 = vmatprep.subr.bf16.mxu0 0
        %613 = vmatpush1.bf16.xpose.msra.mxu0 0
        %614 = vmatprep.subr.bf16.mxu0 0
        %615 = vmatpush1.bf16.xpose.msra.mxu0 0
        %616 = vmatprep.subr.bf16.mxu0 0
        %617 = vmatpush1.bf16.xpose.msra.mxu0 0
        %618 = vmatprep.subr.bf16.mxu0 0
        %619 = vmatpush1.bf16.xpose.msra.mxu0 0
        %620 = vmatprep.subr.bf16.mxu0 0
        %621 = vmatpush1.bf16.xpose.msra.mxu0 0
        %622 = vmatprep.subr.bf16.mxu0 0
        %623 = vmatpush1.bf16.xpose.msra.mxu0 0
        %624 = vmatprep.subr.bf16.mxu0 0
        %625 = vmatpush1.bf16.xpose.msra.mxu0 0
        %626 = vmatprep.subr.bf16.mxu0 0
        %627 = vmatpush1.bf16.xpose.msra.mxu0 0
        %628 = vmatprep.subr.bf16.mxu0 0
        %629 = vmatpush1.bf16.xpose.msra.mxu0 0
        %630 = vmatprep.subr.bf16.mxu0 0
        %631 = vmatpush1.bf16.xpose.msra.mxu0 0
        %632 = vmatprep.subr.bf16.mxu0 0
        %633 = vmatpush1.bf16.xpose.msra.mxu0 0
        %634 = vmatprep.subr.bf16.mxu0 0
        %635 = vmatpush1.bf16.xpose.msra.mxu0 0
        %636 = vmatprep.subr.bf16.mxu0 0
        %637 = vmatpush1.bf16.xpose.msra.mxu0 0
        %638 = vmatprep.mubr.bf16.mxu0 0
        %639 = vmatmul.mubr.bf16.gmra.mrb[0].mxu0 %v601
        %v640 = vpop.f32.mrb[0].mxu0
        %v641 = vadd.f32 0.0, %v640
        %v642 = vpop.f32.mrb[0].mxu0
        %v643 = vpop.f32.mrb[0].mxu0
        %v644 = vpop.f32.mrb[0].mxu0
        %645 = vdwg.mxu0
        %647 = vrot.lane.b32.xlu0 %v397, 96
        %v648 = vpop.permute.xlu0 %647
        %v650 = vsel %vm403, %v367, 0
        %v653 = vsel %vm403, %v648, 0
        %655 = vmatprep.subr.bf16.mxu0 0
        %656 = vmatpush1.bf16.xpose.msra.mxu0 %v653
        %657 = vmatprep.subr.bf16.mxu0 0
        %658 = vmatpush1.bf16.xpose.msra.mxu0 0
        %659 = vmatprep.subr.bf16.mxu0 0
        %660 = vmatpush1.bf16.xpose.msra.mxu0 0
        %661 = vmatprep.subr.bf16.mxu0 0
        %662 = vmatpush1.bf16.xpose.msra.mxu0 0
        %663 = vmatprep.subr.bf16.mxu0 0
        %664 = vmatpush1.bf16.xpose.msra.mxu0 0
        %665 = vmatprep.subr.bf16.mxu0 0
        %666 = vmatpush1.bf16.xpose.msra.mxu0 0
        %667 = vmatprep.subr.bf16.mxu0 0
        %668 = vmatpush1.bf16.xpose.msra.mxu0 0
        %669 = vmatprep.subr.bf16.mxu0 0
        %670 = vmatpush1.bf16.xpose.msra.mxu0 0
        %671 = vmatprep.subr.bf16.mxu0 0
        %672 = vmatpush1.bf16.xpose.msra.mxu0 0
        %673 = vmatprep.subr.bf16.mxu0 0
        %674 = vmatpush1.bf16.xpose.msra.mxu0 0
        %675 = vmatprep.subr.bf16.mxu0 0
        %676 = vmatpush1.bf16.xpose.msra.mxu0 0
        %677 = vmatprep.subr.bf16.mxu0 0
        %678 = vmatpush1.bf16.xpose.msra.mxu0 0
        %679 = vmatprep.subr.bf16.mxu0 0
        %680 = vmatpush1.bf16.xpose.msra.mxu0 0
        %681 = vmatprep.subr.bf16.mxu0 0
        %682 = vmatpush1.bf16.xpose.msra.mxu0 0
        %683 = vmatprep.subr.bf16.mxu0 0
        %684 = vmatpush1.bf16.xpose.msra.mxu0 0
        %685 = vmatprep.subr.bf16.mxu0 0
        %686 = vmatpush1.bf16.xpose.msra.mxu0 0
        %687 = vmatprep.mubr.bf16.mxu0 0
        %688 = vmatmul.mubr.bf16.gmra.mrb[0].mxu0 %v650
        %v689 = vpop.f32.mrb[0].mxu0
        %v690 = vadd.f32 0.0, %v689
        %v691 = vpop.f32.mrb[0].mxu0
        %v692 = vpop.f32.mrb[0].mxu0
        %v693 = vpop.f32.mrb[0].mxu0
        %694 = vdwg.mxu0
        %696 = vrot.lane.b32.xlu0 %v398, 96
        %v697 = vpop.permute.xlu0 %696
        %v699 = vsel %vm403, %v368, 0
        %v702 = vsel %vm403, %v697, 0
        %704 = vmatprep.subr.bf16.mxu0 0
        %705 = vmatpush1.bf16.xpose.msra.mxu0 %v702
        %706 = vmatprep.subr.bf16.mxu0 0
        %707 = vmatpush1.bf16.xpose.msra.mxu0 0
        %708 = vmatprep.subr.bf16.mxu0 0
        %709 = vmatpush1.bf16.xpose.msra.mxu0 0
        %710 = vmatprep.subr.bf16.mxu0 0
        %711 = vmatpush1.bf16.xpose.msra.mxu0 0
        %712 = vmatprep.subr.bf16.mxu0 0
        %713 = vmatpush1.bf16.xpose.msra.mxu0 0
        %714 = vmatprep.subr.bf16.mxu0 0
        %715 = vmatpush1.bf16.xpose.msra.mxu0 0
        %716 = vmatprep.subr.bf16.mxu0 0
        %717 = vmatpush1.bf16.xpose.msra.mxu0 0
        %718 = vmatprep.subr.bf16.mxu0 0
        %719 = vmatpush1.bf16.xpose.msra.mxu0 0
        %720 = vmatprep.subr.bf16.mxu0 0
        %721 = vmatpush1.bf16.xpose.msra.mxu0 0
        %722 = vmatprep.subr.bf16.mxu0 0
        %723 = vmatpush1.bf16.xpose.msra.mxu0 0
        %724 = vmatprep.subr.bf16.mxu0 0
        %725 = vmatpush1.bf16.xpose.msra.mxu0 0
        %726 = vmatprep.subr.bf16.mxu0 0
        %727 = vmatpush1.bf16.xpose.msra.mxu0 0
        %728 = vmatprep.subr.bf16.mxu0 0
        %729 = vmatpush1.bf16.xpose.msra.mxu0 0
        %730 = vmatprep.subr.bf16.mxu0 0
        %731 = vmatpush1.bf16.xpose.msra.mxu0 0
        %732 = vmatprep.subr.bf16.mxu0 0
        %733 = vmatpush1.bf16.xpose.msra.mxu0 0
        %734 = vmatprep.subr.bf16.mxu0 0
        %735 = vmatpush1.bf16.xpose.msra.mxu0 0
        %736 = vmatprep.mubr.bf16.mxu0 0
        %737 = vmatmul.mubr.bf16.gmra.mrb[0].mxu0 %v699
        %v738 = vpop.f32.mrb[0].mxu0
        %v739 = vadd.f32 0.0, %v738
        %v740 = vpop.f32.mrb[0].mxu0
        %v741 = vpop.f32.mrb[0].mxu0
        %v742 = vpop.f32.mrb[0].mxu0
        %743 = vdwg.mxu0
        %745 = vrot.lane.b32.xlu0 %v399, 96
        %v746 = vpop.permute.xlu0 %745
        %v748 = vsel %vm403, %v369, 0
        %v751 = vsel %vm403, %v746, 0
        %753 = vmatprep.subr.bf16.mxu0 0
        %754 = vmatpush1.bf16.xpose.msra.mxu0 %v751
        %755 = vmatprep.subr.bf16.mxu0 0
        %756 = vmatpush1.bf16.xpose.msra.mxu0 0
        %757 = vmatprep.subr.bf16.mxu0 0
        %758 = vmatpush1.bf16.xpose.msra.mxu0 0
        %759 = vmatprep.subr.bf16.mxu0 0
        %760 = vmatpush1.bf16.xpose.msra.mxu0 0
        %761 = vmatprep.subr.bf16.mxu0 0
        %762 = vmatpush1.bf16.xpose.msra.mxu0 0
        %763 = vmatprep.subr.bf16.mxu0 0
        %764 = vmatpush1.bf16.xpose.msra.mxu0 0
        %765 = vmatprep.subr.bf16.mxu0 0
        %766 = vmatpush1.bf16.xpose.msra.mxu0 0
        %767 = vmatprep.subr.bf16.mxu0 0
        %768 = vmatpush1.bf16.xpose.msra.mxu0 0
        %769 = vmatprep.subr.bf16.mxu0 0
        %770 = vmatpush1.bf16.xpose.msra.mxu0 0
        %771 = vmatprep.subr.bf16.mxu0 0
        %772 = vmatpush1.bf16.xpose.msra.mxu0 0
        %773 = vmatprep.subr.bf16.mxu0 0
        %774 = vmatpush1.bf16.xpose.msra.mxu0 0
        %775 = vmatprep.subr.bf16.mxu0 0
        %776 = vmatpush1.bf16.xpose.msra.mxu0 0
        %777 = vmatprep.subr.bf16.mxu0 0
        %778 = vmatpush1.bf16.xpose.msra.mxu0 0
        %779 = vmatprep.subr.bf16.mxu0 0
        %780 = vmatpush1.bf16.xpose.msra.mxu0 0
        %781 = vmatprep.subr.bf16.mxu0 0
        %782 = vmatpush1.bf16.xpose.msra.mxu0 0
        %783 = vmatprep.subr.bf16.mxu0 0
        %784 = vmatpush1.bf16.xpose.msra.mxu0 0
        %785 = vmatprep.mubr.bf16.mxu0 0
        %786 = vmatmul.mubr.bf16.gmra.mrb[0].mxu0 %v748
        %v787 = vpop.f32.mrb[0].mxu0
        %v788 = vadd.f32 0.0, %v787
        %v789 = vpop.f32.mrb[0].mxu0
        %v790 = vpop.f32.mrb[0].mxu0
        %v791 = vpop.f32.mrb[0].mxu0
        %792 = vdwg.mxu0
        %vm793 = vcmask 64512
        %v794 = vsel %vm793, %v445, -inf
        %795 = vmax.xlane.f32.xlu0 %v794
        %v796 = vpop.xlane.xlu0 %795
        %v797 = vsel %vm793, %v494, -inf
        %798 = vmax.xlane.f32.xlu0 %v797
        %v799 = vpop.xlane.xlu0 %798
        %v800 = vsel %vm793, %v543, -inf
        %801 = vmax.xlane.f32.xlu0 %v800
        %v802 = vpop.xlane.xlu0 %801
        %v803 = vsel %vm793, %v592, -inf
        %804 = vmax.xlane.f32.xlu0 %v803
        %v805 = vpop.xlane.xlu0 %804
        %v806 = vsel %vm793, %v641, -inf
        %807 = vmax.xlane.f32.xlu0 %v806
        %v808 = vpop.xlane.xlu0 %807
        %v809 = vsel %vm793, %v690, -inf
        %810 = vmax.xlane.f32.xlu0 %v809
        %v811 = vpop.xlane.xlu0 %810
        %v812 = vsel %vm793, %v739, -inf
        %813 = vmax.xlane.f32.xlu0 %v812
        %v814 = vpop.xlane.xlu0 %813
        %v815 = vsel %vm793, %v788, -inf
        %816 = vmax.xlane.f32.xlu0 %v815
        %v817 = vpop.xlane.xlu0 %816
        %v818 = vsub.f32 %v445, %v796
        %v819 = vsub.f32 %v494, %v799
        %v820 = vsub.f32 %v543, %v802
        %v821 = vsub.f32 %v592, %v805
        %v822 = vsub.f32 %v641, %v808
        %v823 = vsub.f32 %v690, %v811
        %v824 = vsub.f32 %v739, %v814
        %v825 = vsub.f32 %v788, %v817
        %v826 = vmul.f32 %v818, 1.442695
        %v827 = vpow.pop %v826
        %v828 = vmul.f32 %v819, 1.442695
        %v829 = vpow.pop %v828
        %v830 = vmul.f32 %v820, 1.442695
        %v831 = vpow.pop %v830
        %v832 = vmul.f32 %v821, 1.442695
        %v833 = vpow.pop %v832
        %v834 = vmul.f32 %v822, 1.442695
        %v835 = vpow.pop %v834
        %v836 = vmul.f32 %v823, 1.442695
        %v837 = vpow.pop %v836
        %v838 = vmul.f32 %v824, 1.442695
        %v839 = vpow.pop %v838
        %v840 = vmul.f32 %v825, 1.442695
        %v841 = vpow.pop %v840
        %v842 = vsel %vm793, %v827, 0.0
        %843 = vadd.xlane.f32.xlu0 %v842
        %v844 = vpop.xlane.xlu0 %843
        %v845 = vsel %vm793, %v829, 0.0
        %846 = vadd.xlane.f32.xlu0 %v845
        %v847 = vpop.xlane.xlu0 %846
        %v848 = vsel %vm793, %v831, 0.0
        %849 = vadd.xlane.f32.xlu0 %v848
        %v850 = vpop.xlane.xlu0 %849
        %v851 = vsel %vm793, %v833, 0.0
        %852 = vadd.xlane.f32.xlu0 %v851
        %v853 = vpop.xlane.xlu0 %852
        %v854 = vsel %vm793, %v835, 0.0
        %855 = vadd.xlane.f32.xlu0 %v854
        %v856 = vpop.xlane.xlu0 %855
        %v857 = vsel %vm793, %v837, 0.0
        %858 = vadd.xlane.f32.xlu0 %v857
        %v859 = vpop.xlane.xlu0 %858
        %v860 = vsel %vm793, %v839, 0.0
        %861 = vadd.xlane.f32.xlu0 %v860
        %v862 = vpop.xlane.xlu0 %861
        %v863 = vsel %vm793, %v841, 0.0
        %864 = vadd.xlane.f32.xlu0 %v863
        %v865 = vpop.xlane.xlu0 %864
        %v866 = vrcp.pop %v844
        %v867 = vrcp.pop %v847
        %v868 = vrcp.pop %v850
        %v869 = vrcp.pop %v853
        %v870 = vrcp.pop %v856
        %v871 = vrcp.pop %v859
        %v872 = vrcp.pop %v862
        %v873 = vrcp.pop %v865
        %v874 = vmul.f32 %v827, %v866
        %v875 = vmul.f32 %v829, %v867
        %v876 = vmul.f32 %v831, %v868
        %v877 = vmul.f32 %v833, %v869
        %v878 = vmul.f32 %v835, %v870
        %v879 = vmul.f32 %v837, %v871
        %v880 = vmul.f32 %v839, %v872
        %v881 = vmul.f32 %v841, %v873
        %v882 = vpack.c.bf16 %v874, %v874
        %v883 = vpack.c.bf16 %v875, %v875
        %v884 = vpack.c.bf16 %v876, %v876
        %v885 = vpack.c.bf16 %v877, %v877
        %v886 = vpack.c.bf16 %v878, %v878
        %v887 = vpack.c.bf16 %v879, %v879
        %v888 = vpack.c.bf16 %v880, %v880
        %v889 = vpack.c.bf16 %v881, %v881
        %890 = vrot.lane.b32.xlu0 %v392, 64
        %v891 = vpop.permute.xlu0 %890
        %v893 = vsel %vm793, %v882, 0
        %vm895 = vcmask 1043456
        %v897 = vsel %vm895, %v891, 0
        %899 = vmatprep.subr.bf16.mxu0 0
        %900 = vmatpush1.bf16.msra.mxu0 %v897
        %901 = vmatprep.subr.bf16.mxu0 0
        %902 = vmatpush1.bf16.msra.mxu0 0
        %903 = vmatprep.subr.bf16.mxu0 0
        %904 = vmatpush1.bf16.msra.mxu0 0
        %905 = vmatprep.subr.bf16.mxu0 0
        %906 = vmatpush1.bf16.msra.mxu0 0
        %907 = vmatprep.subr.bf16.mxu0 0
        %908 = vmatpush1.bf16.msra.mxu0 0
        %909 = vmatprep.subr.bf16.mxu0 0
        %910 = vmatpush1.bf16.msra.mxu0 0
        %911 = vmatprep.subr.bf16.mxu0 0
        %912 = vmatpush1.bf16.msra.mxu0 0
        %913 = vmatprep.subr.bf16.mxu0 0
        %914 = vmatpush1.bf16.msra.mxu0 0
        %915 = vmatprep.subr.bf16.mxu0 0
        %916 = vmatpush1.bf16.msra.mxu0 0
        %917 = vmatprep.subr.bf16.mxu0 0
        %918 = vmatpush1.bf16.msra.mxu0 0
        %919 = vmatprep.subr.bf16.mxu0 0
        %920 = vmatpush1.bf16.msra.mxu0 0
        %921 = vmatprep.subr.bf16.mxu0 0
        %922 = vmatpush1.bf16.msra.mxu0 0
        %923 = vmatprep.subr.bf16.mxu0 0
        %924 = vmatpush1.bf16.msra.mxu0 0
        %925 = vmatprep.subr.bf16.mxu0 0
        %926 = vmatpush1.bf16.msra.mxu0 0
        %927 = vmatprep.subr.bf16.mxu0 0
        %928 = vmatpush1.bf16.msra.mxu0 0
        %929 = vmatprep.subr.bf16.mxu0 0
        %930 = vmatpush1.bf16.msra.mxu0 0
        %931 = vmatprep.mubr.bf16.mxu0 0
        %932 = vmatmul.mubr.bf16.gmra.mrb[0].mxu0 %v893
        %v933 = vpop.f32.mrb[0].mxu0
        %v934 = vadd.f32 0.0, %v933
        %v935 = vpop.f32.mrb[0].mxu0
        %v936 = vpop.f32.mrb[0].mxu0
        %v937 = vpop.f32.mrb[0].mxu0
        %938 = vdwg.mxu0
        %939 = vrot.lane.b32.xlu0 %v393, 64
        %v940 = vpop.permute.xlu0 %939
        %v942 = vsel %vm793, %v883, 0
        %v945 = vsel %vm895, %v940, 0
        %947 = vmatprep.subr.bf16.mxu0 0
        %948 = vmatpush1.bf16.msra.mxu0 %v945
        %949 = vmatprep.subr.bf16.mxu0 0
        %950 = vmatpush1.bf16.msra.mxu0 0
        %951 = vmatprep.subr.bf16.mxu0 0
        %952 = vmatpush1.bf16.msra.mxu0 0
        %953 = vmatprep.subr.bf16.mxu0 0
        %954 = vmatpush1.bf16.msra.mxu0 0
        %955 = vmatprep.subr.bf16.mxu0 0
        %956 = vmatpush1.bf16.msra.mxu0 0
        %957 = vmatprep.subr.bf16.mxu0 0
        %958 = vmatpush1.bf16.msra.mxu0 0
        %959 = vmatprep.subr.bf16.mxu0 0
        %960 = vmatpush1.bf16.msra.mxu0 0
        %961 = vmatprep.subr.bf16.mxu0 0
        %962 = vmatpush1.bf16.msra.mxu0 0
        %963 = vmatprep.subr.bf16.mxu0 0
        %964 = vmatpush1.bf16.msra.mxu0 0
        %965 = vmatprep.subr.bf16.mxu0 0
        %966 = vmatpush1.bf16.msra.mxu0 0
        %967 = vmatprep.subr.bf16.mxu0 0
        %968 = vmatpush1.bf16.msra.mxu0 0
        %969 = vmatprep.subr.bf16.mxu0 0
        %970 = vmatpush1.bf16.msra.mxu0 0
        %971 = vmatprep.subr.bf16.mxu0 0
        %972 = vmatpush1.bf16.msra.mxu0 0
        %973 = vmatprep.subr.bf16.mxu0 0
        %974 = vmatpush1.bf16.msra.mxu0 0
        %975 = vmatprep.subr.bf16.mxu0 0
        %976 = vmatpush1.bf16.msra.mxu0 0
        %977 = vmatprep.subr.bf16.mxu0 0
        %978 = vmatpush1.bf16.msra.mxu0 0
        %979 = vmatprep.mubr.bf16.mxu0 0
        %980 = vmatmul.mubr.bf16.gmra.mrb[0].mxu0 %v942
        %v981 = vpop.f32.mrb[0].mxu0
        %v982 = vadd.f32 0.0, %v981
        %v983 = vpop.f32.mrb[0].mxu0
        %v984 = vpop.f32.mrb[0].mxu0
        %v985 = vpop.f32.mrb[0].mxu0
        %986 = vdwg.mxu0
        %987 = vrot.lane.b32.xlu0 %v394, 64
        %v988 = vpop.permute.xlu0 %987
        %v990 = vsel %vm793, %v884, 0
        %v993 = vsel %vm895, %v988, 0
        %995 = vmatprep.subr.bf16.mxu0 0
        %996 = vmatpush1.bf16.msra.mxu0 %v993
        %997 = vmatprep.subr.bf16.mxu0 0
        %998 = vmatpush1.bf16.msra.mxu0 0
        %999 = vmatprep.subr.bf16.mxu0 0
        %1000 = vmatpush1.bf16.msra.mxu0 0
        %1001 = vmatprep.subr.bf16.mxu0 0
        %1002 = vmatpush1.bf16.msra.mxu0 0
        %1003 = vmatprep.subr.bf16.mxu0 0
        %1004 = vmatpush1.bf16.msra.mxu0 0
        %1005 = vmatprep.subr.bf16.mxu0 0
        %1006 = vmatpush1.bf16.msra.mxu0 0
        %1007 = vmatprep.subr.bf16.mxu0 0
        %1008 = vmatpush1.bf16.msra.mxu0 0
        %1009 = vmatprep.subr.bf16.mxu0 0
        %1010 = vmatpush1.bf16.msra.mxu0 0
        %1011 = vmatprep.subr.bf16.mxu0 0
        %1012 = vmatpush1.bf16.msra.mxu0 0
        %1013 = vmatprep.subr.bf16.mxu0 0
        %1014 = vmatpush1.bf16.msra.mxu0 0
        %1015 = vmatprep.subr.bf16.mxu0 0
        %1016 = vmatpush1.bf16.msra.mxu0 0
        %1017 = vmatprep.subr.bf16.mxu0 0
        %1018 = vmatpush1.bf16.msra.mxu0 0
        %1019 = vmatprep.subr.bf16.mxu0 0
        %1020 = vmatpush1.bf16.msra.mxu0 0
        %1021 = vmatprep.subr.bf16.mxu0 0
        %1022 = vmatpush1.bf16.msra.mxu0 0
        %1023 = vmatprep.subr.bf16.mxu0 0
        %1024 = vmatpush1.bf16.msra.mxu0 0
        %1025 = vmatprep.subr.bf16.mxu0 0
        %1026 = vmatpush1.bf16.msra.mxu0 0
        %1027 = vmatprep.mubr.bf16.mxu0 0
        %1028 = vmatmul.mubr.bf16.gmra.mrb[0].mxu0 %v990
        %v1029 = vpop.f32.mrb[0].mxu0
        %v1030 = vadd.f32 0.0, %v1029
        %v1031 = vpop.f32.mrb[0].mxu0
        %v1032 = vpop.f32.mrb[0].mxu0
        %v1033 = vpop.f32.mrb[0].mxu0
        %1034 = vdwg.mxu0
        %1035 = vrot.lane.b32.xlu0 %v395, 64
        %v1036 = vpop.permute.xlu0 %1035
        %v1038 = vsel %vm793, %v885, 0
        %v1041 = vsel %vm895, %v1036, 0
        %1043 = vmatprep.subr.bf16.mxu0 0
        %1044 = vmatpush1.bf16.msra.mxu0 %v1041
        %1045 = vmatprep.subr.bf16.mxu0 0
        %1046 = vmatpush1.bf16.msra.mxu0 0
        %1047 = vmatprep.subr.bf16.mxu0 0
        %1048 = vmatpush1.bf16.msra.mxu0 0
        %1049 = vmatprep.subr.bf16.mxu0 0
        %1050 = vmatpush1.bf16.msra.mxu0 0
        %1051 = vmatprep.subr.bf16.mxu0 0
        %1052 = vmatpush1.bf16.msra.mxu0 0
        %1053 = vmatprep.subr.bf16.mxu0 0
        %1054 = vmatpush1.bf16.msra.mxu0 0
        %1055 = vmatprep.subr.bf16.mxu0 0
        %1056 = vmatpush1.bf16.msra.mxu0 0
        %1057 = vmatprep.subr.bf16.mxu0 0
        %1058 = vmatpush1.bf16.msra.mxu0 0
        %1059 = vmatprep.subr.bf16.mxu0 0
        %1060 = vmatpush1.bf16.msra.mxu0 0
        %1061 = vmatprep.subr.bf16.mxu0 0
        %1062 = vmatpush1.bf16.msra.mxu0 0
        %1063 = vmatprep.subr.bf16.mxu0 0
        %1064 = vmatpush1.bf16.msra.mxu0 0
        %1065 = vmatprep.subr.bf16.mxu0 0
        %1066 = vmatpush1.bf16.msra.mxu0 0
        %1067 = vmatprep.subr.bf16.mxu0 0
        %1068 = vmatpush1.bf16.msra.mxu0 0
        %1069 = vmatprep.subr.bf16.mxu0 0
        %1070 = vmatpush1.bf16.msra.mxu0 0
        %1071 = vmatprep.subr.bf16.mxu0 0
        %1072 = vmatpush1.bf16.msra.mxu0 0
        %1073 = vmatprep.subr.bf16.mxu0 0
        %1074 = vmatpush1.bf16.msra.mxu0 0
        %1075 = vmatprep.mubr.bf16.mxu0 0
        %1076 = vmatmul.mubr.bf16.gmra.mrb[0].mxu0 %v1038
        %v1077 = vpop.f32.mrb[0].mxu0
        %v1078 = vadd.f32 0.0, %v1077
        %v1079 = vpop.f32.mrb[0].mxu0
        %v1080 = vpop.f32.mrb[0].mxu0
        %v1081 = vpop.f32.mrb[0].mxu0
        %1082 = vdwg.mxu0
        %1083 = vrot.lane.b32.xlu0 %v396, 64
        %v1084 = vpop.permute.xlu0 %1083
        %v1086 = vsel %vm793, %v886, 0
        %v1089 = vsel %vm895, %v1084, 0
        %1091 = vmatprep.subr.bf16.mxu0 0
        %1092 = vmatpush1.bf16.msra.mxu0 %v1089
        %1093 = vmatprep.subr.bf16.mxu0 0
        %1094 = vmatpush1.bf16.msra.mxu0 0
        %1095 = vmatprep.subr.bf16.mxu0 0
        %1096 = vmatpush1.bf16.msra.mxu0 0
        %1097 = vmatprep.subr.bf16.mxu0 0
        %1098 = vmatpush1.bf16.msra.mxu0 0
        %1099 = vmatprep.subr.bf16.mxu0 0
        %1100 = vmatpush1.bf16.msra.mxu0 0
        %1101 = vmatprep.subr.bf16.mxu0 0
        %1102 = vmatpush1.bf16.msra.mxu0 0
        %1103 = vmatprep.subr.bf16.mxu0 0
        %1104 = vmatpush1.bf16.msra.mxu0 0
        %1105 = vmatprep.subr.bf16.mxu0 0
        %1106 = vmatpush1.bf16.msra.mxu0 0
        %1107 = vmatprep.subr.bf16.mxu0 0
        %1108 = vmatpush1.bf16.msra.mxu0 0
        %1109 = vmatprep.subr.bf16.mxu0 0
        %1110 = vmatpush1.bf16.msra.mxu0 0
        %1111 = vmatprep.subr.bf16.mxu0 0
        %1112 = vmatpush1.bf16.msra.mxu0 0
        %1113 = vmatprep.subr.bf16.mxu0 0
        %1114 = vmatpush1.bf16.msra.mxu0 0
        %1115 = vmatprep.subr.bf16.mxu0 0
        %1116 = vmatpush1.bf16.msra.mxu0 0
        %1117 = vmatprep.subr.bf16.mxu0 0
        %1118 = vmatpush1.bf16.msra.mxu0 0
        %1119 = vmatprep.subr.bf16.mxu0 0
        %1120 = vmatpush1.bf16.msra.mxu0 0
        %1121 = vmatprep.subr.bf16.mxu0 0
        %1122 = vmatpush1.bf16.msra.mxu0 0
        %1123 = vmatprep.mubr.bf16.mxu0 0
        %1124 = vmatmul.mubr.bf16.gmra.mrb[0].mxu0 %v1086
        %v1125 = vpop.f32.mrb[0].mxu0
        %v1126 = vadd.f32 0.0, %v1125
        %v1127 = vpop.f32.mrb[0].mxu0
        %v1128 = vpop.f32.mrb[0].mxu0
        %v1129 = vpop.f32.mrb[0].mxu0
        %1130 = vdwg.mxu0
        %1131 = vrot.lane.b32.xlu0 %v397, 64
        %v1132 = vpop.permute.xlu0 %1131
        %v1134 = vsel %vm793, %v887, 0
        %v1137 = vsel %vm895, %v1132, 0
        %1139 = vmatprep.subr.bf16.mxu0 0
        %1140 = vmatpush1.bf16.msra.mxu0 %v1137
        %1141 = vmatprep.subr.bf16.mxu0 0
        %1142 = vmatpush1.bf16.msra.mxu0 0
        %1143 = vmatprep.subr.bf16.mxu0 0
        %1144 = vmatpush1.bf16.msra.mxu0 0
        %1145 = vmatprep.subr.bf16.mxu0 0
        %1146 = vmatpush1.bf16.msra.mxu0 0
        %1147 = vmatprep.subr.bf16.mxu0 0
        %1148 = vmatpush1.bf16.msra.mxu0 0
        %1149 = vmatprep.subr.bf16.mxu0 0
        %1150 = vmatpush1.bf16.msra.mxu0 0
        %1151 = vmatprep.subr.bf16.mxu0 0
        %1152 = vmatpush1.bf16.msra.mxu0 0
        %1153 = vmatprep.subr.bf16.mxu0 0
        %1154 = vmatpush1.bf16.msra.mxu0 0
        %1155 = vmatprep.subr.bf16.mxu0 0
        %1156 = vmatpush1.bf16.msra.mxu0 0
        %1157 = vmatprep.subr.bf16.mxu0 0
        %1158 = vmatpush1.bf16.msra.mxu0 0
        %1159 = vmatprep.subr.bf16.mxu0 0
        %1160 = vmatpush1.bf16.msra.mxu0 0
        %1161 = vmatprep.subr.bf16.mxu0 0
        %1162 = vmatpush1.bf16.msra.mxu0 0
        %1163 = vmatprep.subr.bf16.mxu0 0
        %1164 = vmatpush1.bf16.msra.mxu0 0
        %1165 = vmatprep.subr.bf16.mxu0 0
        %1166 = vmatpush1.bf16.msra.mxu0 0
        %1167 = vmatprep.subr.bf16.mxu0 0
        %1168 = vmatpush1.bf16.msra.mxu0 0
        %1169 = vmatprep.subr.bf16.mxu0 0
        %1170 = vmatpush1.bf16.msra.mxu0 0
        %1171 = vmatprep.mubr.bf16.mxu0 0
        %1172 = vmatmul.mubr.bf16.gmra.mrb[0].mxu0 %v1134
        %v1173 = vpop.f32.mrb[0].mxu0
        %v1174 = vadd.f32 0.0, %v1173
        %v1175 = vpop.f32.mrb[0].mxu0
        %v1176 = vpop.f32.mrb[0].mxu0
        %v1177 = vpop.f32.mrb[0].mxu0
        %1178 = vdwg.mxu0
        %1179 = vrot.lane.b32.xlu0 %v398, 64
        %v1180 = vpop.permute.xlu0 %1179
        %v1182 = vsel %vm793, %v888, 0
        %v1185 = vsel %vm895, %v1180, 0
        %1187 = vmatprep.subr.bf16.mxu0 0
        %1188 = vmatpush1.bf16.msra.mxu0 %v1185
        %1189 = vmatprep.subr.bf16.mxu0 0
        %1190 = vmatpush1.bf16.msra.mxu0 0
        %1191 = vmatprep.subr.bf16.mxu0 0
        %1192 = vmatpush1.bf16.msra.mxu0 0
        %1193 = vmatprep.subr.bf16.mxu0 0
        %1194 = vmatpush1.bf16.msra.mxu0 0
        %1195 = vmatprep.subr.bf16.mxu0 0
        %1196 = vmatpush1.bf16.msra.mxu0 0
        %1197 = vmatprep.subr.bf16.mxu0 0
        %1198 = vmatpush1.bf16.msra.mxu0 0
        %1199 = vmatprep.subr.bf16.mxu0 0
        %1200 = vmatpush1.bf16.msra.mxu0 0
        %1201 = vmatprep.subr.bf16.mxu0 0
        %1202 = vmatpush1.bf16.msra.mxu0 0
        %1203 = vmatprep.subr.bf16.mxu0 0
        %1204 = vmatpush1.bf16.msra.mxu0 0
        %1205 = vmatprep.subr.bf16.mxu0 0
        %1206 = vmatpush1.bf16.msra.mxu0 0
        %1207 = vmatprep.subr.bf16.mxu0 0
        %1208 = vmatpush1.bf16.msra.mxu0 0
        %1209 = vmatprep.subr.bf16.mxu0 0
        %1210 = vmatpush1.bf16.msra.mxu0 0
        %1211 = vmatprep.subr.bf16.mxu0 0
        %1212 = vmatpush1.bf16.msra.mxu0 0
        %1213 = vmatprep.subr.bf16.mxu0 0
        %1214 = vmatpush1.bf16.msra.mxu0 0
        %1215 = vmatprep.subr.bf16.mxu0 0
        %1216 = vmatpush1.bf16.msra.mxu0 0
        %1217 = vmatprep.subr.bf16.mxu0 0
        %1218 = vmatpush1.bf16.msra.mxu0 0
        %1219 = vmatprep.mubr.bf16.mxu0 0
        %1220 = vmatmul.mubr.bf16.gmra.mrb[0].mxu0 %v1182
        %v1221 = vpop.f32.mrb[0].mxu0
        %v1222 = vadd.f32 0.0, %v1221
        %v1223 = vpop.f32.mrb[0].mxu0
        %v1224 = vpop.f32.mrb[0].mxu0
        %v1225 = vpop.f32.mrb[0].mxu0
        %1226 = vdwg.mxu0
        %1227 = vrot.lane.b32.xlu0 %v399, 64
        %v1228 = vpop.permute.xlu0 %1227
        %v1230 = vsel %vm793, %v889, 0
        %v1233 = vsel %vm895, %v1228, 0
        %1235 = vmatprep.subr.bf16.mxu0 0
        %1236 = vmatpush1.bf16.msra.mxu0 %v1233
        %1237 = vmatprep.subr.bf16.mxu0 0
        %1238 = vmatpush1.bf16.msra.mxu0 0
        %1239 = vmatprep.subr.bf16.mxu0 0
        %1240 = vmatpush1.bf16.msra.mxu0 0
        %1241 = vmatprep.subr.bf16.mxu0 0
        %1242 = vmatpush1.bf16.msra.mxu0 0
        %1243 = vmatprep.subr.bf16.mxu0 0
        %1244 = vmatpush1.bf16.msra.mxu0 0
        %1245 = vmatprep.subr.bf16.mxu0 0
        %1246 = vmatpush1.bf16.msra.mxu0 0
        %1247 = vmatprep.subr.bf16.mxu0 0
        %1248 = vmatpush1.bf16.msra.mxu0 0
        %1249 = vmatprep.subr.bf16.mxu0 0
        %1250 = vmatpush1.bf16.msra.mxu0 0
        %1251 = vmatprep.subr.bf16.mxu0 0
        %1252 = vmatpush1.bf16.msra.mxu0 0
        %1253 = vmatprep.subr.bf16.mxu0 0
        %1254 = vmatpush1.bf16.msra.mxu0 0
        %1255 = vmatprep.subr.bf16.mxu0 0
        %1256 = vmatpush1.bf16.msra.mxu0 0
        %1257 = vmatprep.subr.bf16.mxu0 0
        %1258 = vmatpush1.bf16.msra.mxu0 0
        %1259 = vmatprep.subr.bf16.mxu0 0
        %1260 = vmatpush1.bf16.msra.mxu0 0
        %1261 = vmatprep.subr.bf16.mxu0 0
        %1262 = vmatpush1.bf16.msra.mxu0 0
        %1263 = vmatprep.subr.bf16.mxu0 0
        %1264 = vmatpush1.bf16.msra.mxu0 0
        %1265 = vmatprep.subr.bf16.mxu0 0
        %1266 = vmatpush1.bf16.msra.mxu0 0
        %1267 = vmatprep.mubr.bf16.mxu0 0
        %1268 = vmatmul.mubr.bf16.gmra.mrb[0].mxu0 %v1230
        %v1269 = vpop.f32.mrb[0].mxu0
        %v1270 = vadd.f32 0.0, %v1269
        %v1271 = vpop.f32.mrb[0].mxu0
        %v1272 = vpop.f32.mrb[0].mxu0
        %v1273 = vpop.f32.mrb[0].mxu0
        %1274 = vdwg.mxu0
        %v1275 = vpack.c.bf16 %v934, %v934
        %v1276 = vpack.c.bf16 %v982, %v982
        %v1277 = vpack.c.bf16 %v1030, %v1030
        %v1278 = vpack.c.bf16 %v1078, %v1078
        %v1279 = vpack.c.bf16 %v1126, %v1126
        %v1280 = vpack.c.bf16 %v1174, %v1174
        %v1281 = vpack.c.bf16 %v1222, %v1222
        %v1282 = vpack.c.bf16 %v1270, %v1270
        %v1283 = vld [vmem:[#allocation7] sm:$0x3]
        %v1284 = vld [vmem:[#allocation7 + $0x2] sm:$0x3]
        %v1285 = vld [vmem:[#allocation7 + $0x4] sm:$0x3]
        %v1286 = vld [vmem:[#allocation7 + $0x6] sm:$0x3]
        %v1287 = vld [vmem:[#allocation7 + $0x8] sm:$0x3]
        %v1288 = vld [vmem:[#allocation7 + $0xa] sm:$0x3]
        %v1289 = vld [vmem:[#allocation7 + $0xc] sm:$0x3]
        %v1290 = vld [vmem:[#allocation7 + $0xe] sm:$0x3]
        %v1292 = vsel %vm403, %v1275, 0
        %vm1294 = vcmask 1041408
        %v1296 = vsel %vm1294, %v1283, 0
        %1298 = vmatprep.subr.bf16.mxu0 0
        %1299 = vmatpush1.bf16.msra.mxu0 %v1296
        %1300 = vmatprep.subr.bf16.mxu0 0
        %1301 = vmatpush1.bf16.msra.mxu0 0
        %1302 = vmatprep.subr.bf16.mxu0 0
        %1303 = vmatpush1.bf16.msra.mxu0 0
        %1304 = vmatprep.subr.bf16.mxu0 0
        %1305 = vmatpush1.bf16.msra.mxu0 0
        %1306 = vmatprep.subr.bf16.mxu0 0
        %1307 = vmatpush1.bf16.msra.mxu0 0
        %1308 = vmatprep.subr.bf16.mxu0 0
        %1309 = vmatpush1.bf16.msra.mxu0 0
        %1310 = vmatprep.subr.bf16.mxu0 0
        %1311 = vmatpush1.bf16.msra.mxu0 0
        %1312 = vmatprep.subr.bf16.mxu0 0
        %1313 = vmatpush1.bf16.msra.mxu0 0
        %1314 = vmatprep.subr.bf16.mxu0 0
        %1315 = vmatpush1.bf16.msra.mxu0 0
        %1316 = vmatprep.subr.bf16.mxu0 0
        %1317 = vmatpush1.bf16.msra.mxu0 0
        %1318 = vmatprep.subr.bf16.mxu0 0
        %1319 = vmatpush1.bf16.msra.mxu0 0
        %1320 = vmatprep.subr.bf16.mxu0 0
        %1321 = vmatpush1.bf16.msra.mxu0 0
        %1322 = vmatprep.subr.bf16.mxu0 0
        %1323 = vmatpush1.bf16.msra.mxu0 0
        %1324 = vmatprep.subr.bf16.mxu0 0
        %1325 = vmatpush1.bf16.msra.mxu0 0
        %1326 = vmatprep.subr.bf16.mxu0 0
        %1327 = vmatpush1.bf16.msra.mxu0 0
        %1328 = vmatprep.subr.bf16.mxu0 0
        %1329 = vmatpush1.bf16.msra.mxu0 0
        %1330 = vmatprep.mubr.bf16.mxu0 0
        %1331 = vmatmul.mubr.bf16.gmra.mrb[0].mxu0 %v1292
        %v1332 = vpop.f32.mrb[0].mxu0
        %v1333 = vadd.f32 0.0, %v1332
        %v1334 = vpop.f32.mrb[0].mxu0
        %v1335 = vpop.f32.mrb[0].mxu0
        %v1336 = vpop.f32.mrb[0].mxu0
        %1337 = vdwg.mxu0
        %v1339 = vsel %vm403, %v1276, 0
        %v1342 = vsel %vm1294, %v1284, 0
        %1344 = vmatprep.subr.bf16.mxu0 0
        %1345 = vmatpush1.bf16.msra.mxu0 %v1342
        %1346 = vmatprep.subr.bf16.mxu0 0
        %1347 = vmatpush1.bf16.msra.mxu0 0
        %1348 = vmatprep.subr.bf16.mxu0 0
        %1349 = vmatpush1.bf16.msra.mxu0 0
        %1350 = vmatprep.subr.bf16.mxu0 0
        %1351 = vmatpush1.bf16.msra.mxu0 0
        %1352 = vmatprep.subr.bf16.mxu0 0
        %1353 = vmatpush1.bf16.msra.mxu0 0
        %1354 = vmatprep.subr.bf16.mxu0 0
        %1355 = vmatpush1.bf16.msra.mxu0 0
        %1356 = vmatprep.subr.bf16.mxu0 0
        %1357 = vmatpush1.bf16.msra.mxu0 0
        %1358 = vmatprep.subr.bf16.mxu0 0
        %1359 = vmatpush1.bf16.msra.mxu0 0
        %1360 = vmatprep.subr.bf16.mxu0 0
        %1361 = vmatpush1.bf16.msra.mxu0 0
        %1362 = vmatprep.subr.bf16.mxu0 0
        %1363 = vmatpush1.bf16.msra.mxu0 0
        %1364 = vmatprep.subr.bf16.mxu0 0
        %1365 = vmatpush1.bf16.msra.mxu0 0
        %1366 = vmatprep.subr.bf16.mxu0 0
        %1367 = vmatpush1.bf16.msra.mxu0 0
        %1368 = vmatprep.subr.bf16.mxu0 0
        %1369 = vmatpush1.bf16.msra.mxu0 0
        %1370 = vmatprep.subr.bf16.mxu0 0
        %1371 = vmatpush1.bf16.msra.mxu0 0
        %1372 = vmatprep.subr.bf16.mxu0 0
        %1373 = vmatpush1.bf16.msra.mxu0 0
        %1374 = vmatprep.subr.bf16.mxu0 0
        %1375 = vmatpush1.bf16.msra.mxu0 0
        %1376 = vmatprep.mubr.bf16.mxu0 0
        %1377 = vmatmul.mubr.bf16.gmra.mrb[0].mxu0 %v1339
        %v1378 = vpop.f32.mrb[0].mxu0
        %v1379 = vadd.f32 0.0, %v1378
        %v1380 = vpop.f32.mrb[0].mxu0
        %v1381 = vpop.f32.mrb[0].mxu0
        %v1382 = vpop.f32.mrb[0].mxu0
        %1383 = vdwg.mxu0
        %v1385 = vsel %vm403, %v1277, 0
        %v1388 = vsel %vm1294, %v1285, 0
        %1390 = vmatprep.subr.bf16.mxu0 0
        %1391 = vmatpush1.bf16.msra.mxu0 %v1388
        %1392 = vmatprep.subr.bf16.mxu0 0
        %1393 = vmatpush1.bf16.msra.mxu0 0
        %1394 = vmatprep.subr.bf16.mxu0 0
        %1395 = vmatpush1.bf16.msra.mxu0 0
        %1396 = vmatprep.subr.bf16.mxu0 0
        %1397 = vmatpush1.bf16.msra.mxu0 0
        %1398 = vmatprep.subr.bf16.mxu0 0
        %1399 = vmatpush1.bf16.msra.mxu0 0
        %1400 = vmatprep.subr.bf16.mxu0 0
        %1401 = vmatpush1.bf16.msra.mxu0 0
        %1402 = vmatprep.subr.bf16.mxu0 0
        %1403 = vmatpush1.bf16.msra.mxu0 0
        %1404 = vmatprep.subr.bf16.mxu0 0
        %1405 = vmatpush1.bf16.msra.mxu0 0
        %1406 = vmatprep.subr.bf16.mxu0 0
        %1407 = vmatpush1.bf16.msra.mxu0 0
        %1408 = vmatprep.subr.bf16.mxu0 0
        %1409 = vmatpush1.bf16.msra.mxu0 0
        %1410 = vmatprep.subr.bf16.mxu0 0
        %1411 = vmatpush1.bf16.msra.mxu0 0
        %1412 = vmatprep.subr.bf16.mxu0 0
        %1413 = vmatpush1.bf16.msra.mxu0 0
        %1414 = vmatprep.subr.bf16.mxu0 0
        %1415 = vmatpush1.bf16.msra.mxu0 0
        %1416 = vmatprep.subr.bf16.mxu0 0
        %1417 = vmatpush1.bf16.msra.mxu0 0
        %1418 = vmatprep.subr.bf16.mxu0 0
        %1419 = vmatpush1.bf16.msra.mxu0 0
        %1420 = vmatprep.subr.bf16.mxu0 0
        %1421 = vmatpush1.bf16.msra.mxu0 0
        %1422 = vmatprep.mubr.bf16.mxu0 0
        %1423 = vmatmul.mubr.bf16.gmra.mrb[0].mxu0 %v1385
        %v1424 = vpop.f32.mrb[0].mxu0
        %v1425 = vadd.f32 0.0, %v1424
        %v1426 = vpop.f32.mrb[0].mxu0
        %v1427 = vpop.f32.mrb[0].mxu0
        %v1428 = vpop.f32.mrb[0].mxu0
        %1429 = vdwg.mxu0
        %v1431 = vsel %vm403, %v1278, 0
        %v1434 = vsel %vm1294, %v1286, 0
        %1436 = vmatprep.subr.bf16.mxu0 0
        %1437 = vmatpush1.bf16.msra.mxu0 %v1434
        %1438 = vmatprep.subr.bf16.mxu0 0
        %1439 = vmatpush1.bf16.msra.mxu0 0
        %1440 = vmatprep.subr.bf16.mxu0 0
        %1441 = vmatpush1.bf16.msra.mxu0 0
        %1442 = vmatprep.subr.bf16.mxu0 0
        %1443 = vmatpush1.bf16.msra.mxu0 0
        %1444 = vmatprep.subr.bf16.mxu0 0
        %1445 = vmatpush1.bf16.msra.mxu0 0
        %1446 = vmatprep.subr.bf16.mxu0 0
        %1447 = vmatpush1.bf16.msra.mxu0 0
        %1448 = vmatprep.subr.bf16.mxu0 0
        %1449 = vmatpush1.bf16.msra.mxu0 0
        %1450 = vmatprep.subr.bf16.mxu0 0
        %1451 = vmatpush1.bf16.msra.mxu0 0
        %1452 = vmatprep.subr.bf16.mxu0 0
        %1453 = vmatpush1.bf16.msra.mxu0 0
        %1454 = vmatprep.subr.bf16.mxu0 0
        %1455 = vmatpush1.bf16.msra.mxu0 0
        %1456 = vmatprep.subr.bf16.mxu0 0
        %1457 = vmatpush1.bf16.msra.mxu0 0
        %1458 = vmatprep.subr.bf16.mxu0 0
        %1459 = vmatpush1.bf16.msra.mxu0 0
        %1460 = vmatprep.subr.bf16.mxu0 0
        %1461 = vmatpush1.bf16.msra.mxu0 0
        %1462 = vmatprep.subr.bf16.mxu0 0
        %1463 = vmatpush1.bf16.msra.mxu0 0
        %1464 = vmatprep.subr.bf16.mxu0 0
        %1465 = vmatpush1.bf16.msra.mxu0 0
        %1466 = vmatprep.subr.bf16.mxu0 0
        %1467 = vmatpush1.bf16.msra.mxu0 0
        %1468 = vmatprep.mubr.bf16.mxu0 0
        %1469 = vmatmul.mubr.bf16.gmra.mrb[0].mxu0 %v1431
        %v1470 = vpop.f32.mrb[0].mxu0
        %v1471 = vadd.f32 0.0, %v1470
        %v1472 = vpop.f32.mrb[0].mxu0
        %v1473 = vpop.f32.mrb[0].mxu0
        %v1474 = vpop.f32.mrb[0].mxu0
        %1475 = vdwg.mxu0
        %v1477 = vsel %vm403, %v1279, 0
        %v1480 = vsel %vm1294, %v1287, 0
        %1482 = vmatprep.subr.bf16.mxu0 0
        %1483 = vmatpush1.bf16.msra.mxu0 %v1480
        %1484 = vmatprep.subr.bf16.mxu0 0
        %1485 = vmatpush1.bf16.msra.mxu0 0
        %1486 = vmatprep.subr.bf16.mxu0 0
        %1487 = vmatpush1.bf16.msra.mxu0 0
        %1488 = vmatprep.subr.bf16.mxu0 0
        %1489 = vmatpush1.bf16.msra.mxu0 0
        %1490 = vmatprep.subr.bf16.mxu0 0
        %1491 = vmatpush1.bf16.msra.mxu0 0
        %1492 = vmatprep.subr.bf16.mxu0 0
        %1493 = vmatpush1.bf16.msra.mxu0 0
        %1494 = vmatprep.subr.bf16.mxu0 0
        %1495 = vmatpush1.bf16.msra.mxu0 0
        %1496 = vmatprep.subr.bf16.mxu0 0
        %1497 = vmatpush1.bf16.msra.mxu0 0
        %1498 = vmatprep.subr.bf16.mxu0 0
        %1499 = vmatpush1.bf16.msra.mxu0 0
        %1500 = vmatprep.subr.bf16.mxu0 0
        %1501 = vmatpush1.bf16.msra.mxu0 0
        %1502 = vmatprep.subr.bf16.mxu0 0
        %1503 = vmatpush1.bf16.msra.mxu0 0
        %1504 = vmatprep.subr.bf16.mxu0 0
        %1505 = vmatpush1.bf16.msra.mxu0 0
        %1506 = vmatprep.subr.bf16.mxu0 0
        %1507 = vmatpush1.bf16.msra.mxu0 0
        %1508 = vmatprep.subr.bf16.mxu0 0
        %1509 = vmatpush1.bf16.msra.mxu0 0
        %1510 = vmatprep.subr.bf16.mxu0 0
        %1511 = vmatpush1.bf16.msra.mxu0 0
        %1512 = vmatprep.subr.bf16.mxu0 0
        %1513 = vmatpush1.bf16.msra.mxu0 0
        %1514 = vmatprep.mubr.bf16.mxu0 0
        %1515 = vmatmul.mubr.bf16.gmra.mrb[0].mxu0 %v1477
        %v1516 = vpop.f32.mrb[0].mxu0
        %v1517 = vadd.f32 0.0, %v1516
        %v1518 = vpop.f32.mrb[0].mxu0
        %v1519 = vpop.f32.mrb[0].mxu0
        %v1520 = vpop.f32.mrb[0].mxu0
        %1521 = vdwg.mxu0
        %v1523 = vsel %vm403, %v1280, 0
        %v1526 = vsel %vm1294, %v1288, 0
        %1528 = vmatprep.subr.bf16.mxu0 0
        %1529 = vmatpush1.bf16.msra.mxu0 %v1526
        %1530 = vmatprep.subr.bf16.mxu0 0
        %1531 = vmatpush1.bf16.msra.mxu0 0
        %1532 = vmatprep.subr.bf16.mxu0 0
        %1533 = vmatpush1.bf16.msra.mxu0 0
        %1534 = vmatprep.subr.bf16.mxu0 0
        %1535 = vmatpush1.bf16.msra.mxu0 0
        %1536 = vmatprep.subr.bf16.mxu0 0
        %1537 = vmatpush1.bf16.msra.mxu0 0
        %1538 = vmatprep.subr.bf16.mxu0 0
        %1539 = vmatpush1.bf16.msra.mxu0 0
        %1540 = vmatprep.subr.bf16.mxu0 0
        %1541 = vmatpush1.bf16.msra.mxu0 0
        %1542 = vmatprep.subr.bf16.mxu0 0
        %1543 = vmatpush1.bf16.msra.mxu0 0
        %1544 = vmatprep.subr.bf16.mxu0 0
        %1545 = vmatpush1.bf16.msra.mxu0 0
        %1546 = vmatprep.subr.bf16.mxu0 0
        %1547 = vmatpush1.bf16.msra.mxu0 0
        %1548 = vmatprep.subr.bf16.mxu0 0
        %1549 = vmatpush1.bf16.msra.mxu0 0
        %1550 = vmatprep.subr.bf16.mxu0 0
        %1551 = vmatpush1.bf16.msra.mxu0 0
        %1552 = vmatprep.subr.bf16.mxu0 0
        %1553 = vmatpush1.bf16.msra.mxu0 0
        %1554 = vmatprep.subr.bf16.mxu0 0
        %1555 = vmatpush1.bf16.msra.mxu0 0
        %1556 = vmatprep.subr.bf16.mxu0 0
        %1557 = vmatpush1.bf16.msra.mxu0 0
        %1558 = vmatprep.subr.bf16.mxu0 0
        %1559 = vmatpush1.bf16.msra.mxu0 0
        %1560 = vmatprep.mubr.bf16.mxu0 0
        %1561 = vmatmul.mubr.bf16.gmra.mrb[0].mxu0 %v1523
        %v1562 = vpop.f32.mrb[0].mxu0
        %v1563 = vadd.f32 0.0, %v1562
        %v1564 = vpop.f32.mrb[0].mxu0
        %v1565 = vpop.f32.mrb[0].mxu0
        %v1566 = vpop.f32.mrb[0].mxu0
        %1567 = vdwg.mxu0
        %v1569 = vsel %vm403, %v1281, 0
        %v1572 = vsel %vm1294, %v1289, 0
        %1574 = vmatprep.subr.bf16.mxu0 0
        %1575 = vmatpush1.bf16.msra.mxu0 %v1572
        %1576 = vmatprep.subr.bf16.mxu0 0
        %1577 = vmatpush1.bf16.msra.mxu0 0
        %1578 = vmatprep.subr.bf16.mxu0 0
        %1579 = vmatpush1.bf16.msra.mxu0 0
        %1580 = vmatprep.subr.bf16.mxu0 0
        %1581 = vmatpush1.bf16.msra.mxu0 0
        %1582 = vmatprep.subr.bf16.mxu0 0
        %1583 = vmatpush1.bf16.msra.mxu0 0
        %1584 = vmatprep.subr.bf16.mxu0 0
        %1585 = vmatpush1.bf16.msra.mxu0 0
        %1586 = vmatprep.subr.bf16.mxu0 0
        %1587 = vmatpush1.bf16.msra.mxu0 0
        %1588 = vmatprep.subr.bf16.mxu0 0
        %1589 = vmatpush1.bf16.msra.mxu0 0
        %1590 = vmatprep.subr.bf16.mxu0 0
        %1591 = vmatpush1.bf16.msra.mxu0 0
        %1592 = vmatprep.subr.bf16.mxu0 0
        %1593 = vmatpush1.bf16.msra.mxu0 0
        %1594 = vmatprep.subr.bf16.mxu0 0
        %1595 = vmatpush1.bf16.msra.mxu0 0
        %1596 = vmatprep.subr.bf16.mxu0 0
        %1597 = vmatpush1.bf16.msra.mxu0 0
        %1598 = vmatprep.subr.bf16.mxu0 0
        %1599 = vmatpush1.bf16.msra.mxu0 0
        %1600 = vmatprep.subr.bf16.mxu0 0
        %1601 = vmatpush1.bf16.msra.mxu0 0
        %1602 = vmatprep.subr.bf16.mxu0 0
        %1603 = vmatpush1.bf16.msra.mxu0 0
        %1604 = vmatprep.subr.bf16.mxu0 0
        %1605 = vmatpush1.bf16.msra.mxu0 0
        %1606 = vmatprep.mubr.bf16.mxu0 0
        %1607 = vmatmul.mubr.bf16.gmra.mrb[0].mxu0 %v1569
        %v1608 = vpop.f32.mrb[0].mxu0
        %v1609 = vadd.f32 0.0, %v1608
        %v1610 = vpop.f32.mrb[0].mxu0
        %v1611 = vpop.f32.mrb[0].mxu0
        %v1612 = vpop.f32.mrb[0].mxu0
        %1613 = vdwg.mxu0
        %v1615 = vsel %vm403, %v1282, 0
        %v1618 = vsel %vm1294, %v1290, 0
        %1620 = vmatprep.subr.bf16.mxu0 0
        %1621 = vmatpush1.bf16.msra.mxu0 %v1618
        %1622 = vmatprep.subr.bf16.mxu0 0
        %1623 = vmatpush1.bf16.msra.mxu0 0
        %1624 = vmatprep.subr.bf16.mxu0 0
        %1625 = vmatpush1.bf16.msra.mxu0 0
        %1626 = vmatprep.subr.bf16.mxu0 0
        %1627 = vmatpush1.bf16.msra.mxu0 0
        %1628 = vmatprep.subr.bf16.mxu0 0
        %1629 = vmatpush1.bf16.msra.mxu0 0
        %1630 = vmatprep.subr.bf16.mxu0 0
        %1631 = vmatpush1.bf16.msra.mxu0 0
        %1632 = vmatprep.subr.bf16.mxu0 0
        %1633 = vmatpush1.bf16.msra.mxu0 0
        %1634 = vmatprep.subr.bf16.mxu0 0
        %1635 = vmatpush1.bf16.msra.mxu0 0
        %1636 = vmatprep.subr.bf16.mxu0 0
        %1637 = vmatpush1.bf16.msra.mxu0 0
        %1638 = vmatprep.subr.bf16.mxu0 0
        %1639 = vmatpush1.bf16.msra.mxu0 0
        %1640 = vmatprep.subr.bf16.mxu0 0
        %1641 = vmatpush1.bf16.msra.mxu0 0
        %1642 = vmatprep.subr.bf16.mxu0 0
        %1643 = vmatpush1.bf16.msra.mxu0 0
        %1644 = vmatprep.subr.bf16.mxu0 0
        %1645 = vmatpush1.bf16.msra.mxu0 0
        %1646 = vmatprep.subr.bf16.mxu0 0
        %1647 = vmatpush1.bf16.msra.mxu0 0
        %1648 = vmatprep.subr.bf16.mxu0 0
        %1649 = vmatpush1.bf16.msra.mxu0 0
        %1650 = vmatprep.subr.bf16.mxu0 0
        %1651 = vmatpush1.bf16.msra.mxu0 0
        %1652 = vmatprep.mubr.bf16.mxu0 0
        %1653 = vmatmul.mubr.bf16.gmra.mrb[0].mxu0 %v1615
        %v1654 = vpop.f32.mrb[0].mxu0
        %v1655 = vadd.f32 0.0, %v1654
        %v1656 = vpop.f32.mrb[0].mxu0
        %v1657 = vpop.f32.mrb[0].mxu0
        %v1658 = vpop.f32.mrb[0].mxu0
        %1659 = vdwg.mxu0
        %v1660 = vsel %vm295, %v1333, 0.0
        %v1661 = vsel %vm295, %v1379, 0.0
        %v1662 = vadd.f32 %v1660, %v1661
        %v1663 = vsel %vm295, %v1425, 0.0
        %v1664 = vadd.f32 %v1662, %v1663
        %v1665 = vsel %vm295, %v1471, 0.0
        %v1666 = vadd.f32 %v1664, %v1665
        %v1667 = vsel %vm295, %v1517, 0.0
        %v1668 = vadd.f32 %v1666, %v1667
        %v1669 = vsel %vm295, %v1563, 0.0
        %v1670 = vadd.f32 %v1668, %v1669
        %v1671 = vsel %vm295, %v1609, 0.0
        %v1672 = vadd.f32 %v1670, %v1671
        %v1673 = vsel %vm295, %v1655, 0.0
        %v1674 = vadd.f32 %v1672, %v1673
        %v1675 = vld [vmem:[%s4] sm:$0x1]
        %v1677 = vlaneseq
        %v1678 = vshrl.u32 %v1677, 7
        %v1679 = vsub.s32 0, %v1678
        %v1680 = vrot.slane %v1675, %v1679
        %v1682 = vadd.f32 %v1674, %v1680
        %1683 = vst.msk [vmem:[%s268] sm:$0xff] %vm295, %v1682
        %s1684 = sand.u32 %s141, 1
        %s1685 = scalar_lea.sflag [#allocation4], %s1684
        %s1686 = sand.u32 %s141, 1
        %s1687 = smul.addr %s1686, 8
        %s1688 = scalar_lea.vmem [#allocation8], %s1687
        // Predicated region
        $region53: #{tpu_custom_call.1} parent=39 // pred_check
          %p1689 = pneg %p151
        $region54: #{tpu_custom_call.1} parent=39 // pred_check_branch
          %1691 = sbr.rel (%p1689) target = $region56
        $region55: #{tpu_custom_call.1} parent=39 // pred_region
          %s1693 = ssub.s32 128, 128
          %1694 = vsyncadd %s1685, %s1693
          %s1695 = smul.addr %s23, 128
          %s1696 = scalar_lea.hbm %s5, %s1695
          %s1698 = sshll.u32 %s1688, 4
          %s1699 = int_to_ptr.vmem [resolvable:$true] %s1698
          %1701 = dma.vmem_to_hbm [thread:$0]  %s1699, 128, %s1696, %s1685
        $region56: #{tpu_custom_call.1} parent=39 // pred_fallthru
          _
      $region40: #{tpu_custom_call.1} parent=5 // pred_fallthru
        _
      %p1702 = scmp.le.s32.totalorder 2, %s18
      // Predicated region
      $region57: #{tpu_custom_call.1} parent=5 // pred_check
        %p1703 = pneg %p1702
      $region58: #{tpu_custom_call.1} parent=5 // pred_check_branch
        %1705 = sbr.rel (%p1703) target = $region60
      $region59: #{tpu_custom_call.1} parent=5 // pred_region
        %s1706 = ssub.s32 %s18, 2
        // Predicated region
        $region61: #{tpu_custom_call.1} parent=59 // pred_check
          %p1707 = pneg %p157
        $region62: #{tpu_custom_call.1} parent=59 // pred_check_branch
          %1709 = sbr.rel (%p1707) target = $region64
        $region63: #{tpu_custom_call.1} parent=59 // pred_region
          %s1710 = sand.u32 %s142, 1
          %s1711 = scalar_lea.sflag [#allocation4], %s1710
          %s1712 = sand.u32 %s142, 1
          %s1713 = smul.addr %s1712, 8
          %s1714 = scalar_lea.vmem [#allocation8], %s1713
          %1715 = dma.done %s1711, 128
        $region64: #{tpu_custom_call.1} parent=59 // pred_fallthru
          _
      $region60: #{tpu_custom_call.1} parent=5 // pred_fallthru
        _
    $region6: #{tpu_custom_call.1} parent=1 // loop_footer
      %s22 = sadd.s32 1, %s18
    $region7: #{tpu_custom_call.1} parent=1 // loop_footer_branch
      %17 = sbr.rel target = $region3
    $region8: #{tpu_custom_call.1} parent=1 // loop_exit
      _
    %1716 = vsyncpa [#allocation3], 1
    %s1717 = scalar_lea.sflag [#allocation3], 1
    %1718 = vsyncpa %s1717, 1
    %1719 = vsyncpa [#allocation6], 1
    %1720 = vsyncpa [#allocation4], 1
    %s1721 = scalar_lea.sflag [#allocation4], 1
    %1722 = vsyncpa %s1721, 1

</llo_original>
